<compile_context>
chip_gen: v5e
topology: v5e:2x2
jax: 0.10.0
libtpu: 0.0.40
codegen_flags: <defaults>
</compile_context>

<pallas_src>
import functools

import jax
import jax.numpy as jnp
from jax.experimental import pallas as pl
from jax.experimental.pallas import tpu as pltpu

_PARAM_COLS = 32


# ---------------------------------------------------------------------------
# Packed-parameter layout (static)
# ---------------------------------------------------------------------------
def _param_layout(C0, C1):
    """Row layout of the packed parameter plane: name -> (row, C_out, C_in, K)."""
    entries = [
        ("pre", C0, 1, 3),                        # preprocess conv (1->C0, k3) + BN
        ("a1", C0, C0, 3), ("a2", C0, C0, 3),     # layer0 block0
        ("b1", C0, C0, 3), ("b2", C0, C0, 3),     # layer0 block1
        ("c1", C1, C0, 3),                        # layer1 block0 conv1 (stride 2)
        ("cs", C1, C0, 1),                        # layer1 block0 projection shortcut
        ("c2", C1, C1, 3),                        # layer1 block0 conv2
        ("d1", C1, C1, 3), ("d2", C1, C1, 3),     # layer1 block1
        ("hx", 1, C1, 1),                         # head conv1x1 (no BN, no bias)
    ]
    layout, row = {}, 0
    for name, co, ci, k in entries:
        layout[name] = (row, co, ci, k)
        row += co
    return layout, row


def pack_params(params, seg=64):
    """Fold BN scale into conv weights and pack everything into 2 flat f32 arrays."""
    C0 = params["pre_w"].shape[0]
    C1 = params["layers"][-1][-1]["w1"].shape[0]
    layout, n_rows = _param_layout(C0, C1)

    blocks = []

    def add(name, w, s=None, b=None):
        row, co, ci, k = layout[name]
        assert w.shape == (co, ci, k), (name, w.shape)
        assert row == sum(blk.shape[0] for blk in blocks)
        wf = w.astype(jnp.float32)
        if s is not None:
            wf = wf * s.astype(jnp.float32)[:, None, None]
        # columns = [ tap0 (C_out,C_in) | tap1 | ... | bias ]
        wf = jnp.transpose(wf, (0, 2, 1)).reshape(co, k * ci)
        if b is not None:
            wf = jnp.concatenate([wf, b.astype(jnp.float32).reshape(co, 1)], axis=1)
        assert wf.shape[1] <= _PARAM_COLS
        blocks.append(jnp.pad(wf, ((0, 0), (0, _PARAM_COLS - wf.shape[1]))))

    (l0b0, l0b1), (l1b0, l1b1) = params["layers"]
    add("pre", params["pre_w"], params["pre_s"], params["pre_b"])
    add("a1", l0b0["w1"], l0b0["s1"], l0b0["b1"])
    add("a2", l0b0["w2"], l0b0["s2"], l0b0["b2"])
    add("b1", l0b1["w1"], l0b1["s1"], l0b1["b1"])
    add("b2", l0b1["w2"], l0b1["s2"], l0b1["b2"])
    add("c1", l1b0["w1"], l1b0["s1"], l1b0["b1"])
    add("cs", l1b0["ws"], l1b0["ss"], l1b0["bs"])
    add("c2", l1b0["w2"], l1b0["s2"], l1b0["b2"])
    add("d1", l1b1["w1"], l1b1["s1"], l1b1["b1"])
    add("d2", l1b1["w2"], l1b1["s2"], l1b1["b2"])
    add("hx", params["c1x1_w"])
    P = jnp.concatenate(blocks, axis=0)
    assert P.shape == (n_rows, _PARAM_COLS)

    n_out, din = params["dense_w"].shape
    assert din <= seg
    wdT = jnp.zeros((seg, n_out), jnp.float32).at[:din, :].set(
        params["dense_w"].T.astype(jnp.float32))
    D = jnp.concatenate(
        [wdT, params["dense_b"].reshape(1, n_out).astype(jnp.float32)], axis=0)
    return P, D


# ---------------------------------------------------------------------------
# Fused kernel
#
# Lane layout (per buffer, per sample segment of `seg` lanes):
#   lane n*seg + 0        : left conv pad (zero)
#   lane n*seg + 1 + m    : position m (m in [0, lh))   [parity or length-50 signal]
#   lanes n*seg + 1+lh .. : zero
# Every conv is 3 accumulating matmuls W_t(C_out,C_in) @ view(C_in, A) on static
# lane-offset views, followed by bias + activation + validity mask, stored back
# at lane offset 1.
# ---------------------------------------------------------------------------
def _make_kernel(N, C0, C1, seg, lh, layout):
    W = N * seg
    A = W - 2

    def kernel(x_ref, p_ref, d_ref, o_ref, he, ho, te, to, g1, g2, hd):
        f32 = jnp.float32

        def wmat(name, t):
            r, co, ci, _k = layout[name]
            return p_ref[r:r + co, t * ci:(t + 1) * ci]

        def bcol(name):
            r, co, ci, k = layout[name]
            return p_ref[r:r + co, k * ci:k * ci + 1]

        def dot(a, b):
            return jnp.dot(a, b, preferred_element_type=f32)

        def relu(v):
            return jnp.maximum(v, 0.0)

        def leaky(v):
            return jnp.where(v >= 0.0, v, 0.01 * v)

        # Validity mask for the A-wide store slab (global lanes 1..W-2): within
        # each `seg`-lane segment only lanes 1..lh hold real positions.
        gl = jax.lax.broadcasted_iota(jnp.int32, (1, A), 1) + 1
        pos = jnp.bitwise_and(gl, seg - 1)
        valid = jnp.logical_and(pos >= 1, pos <= lh)

        def masked(v):
            return jnp.where(valid, v, 0.0)

        # tap views: positions p-1 / p / p+1 relative to the output lane
        def sm1(ref):
            return ref[:, 0:A]

        def s00(ref):
            return ref[:, 1:1 + A]

        def sp1(ref):
            return ref[:, 2:2 + A]

        def store(dst, v):
            dst[:, 1:1 + A] = v

        # ---- zero only pad lanes that are read but never written --------------
        he[:, 0:1] = jnp.zeros((C0, 1), f32)
        ho[:, 0:1] = jnp.zeros((C0, 1), f32)
        te[:, 0:1] = jnp.zeros((C0, 1), f32)
        to[:, 0:1] = jnp.zeros((C0, 1), f32)
        g2[:, 0:1] = jnp.zeros((C1, 1), f32)
        g1[...] = jnp.zeros_like(g1)  # fully read by the output head -> zero all

        # ---- preprocess: conv3(1->C0) + BN + LeakyReLU, parity-split output ---
        rp = layout["pre"][0]
        wpre = p_ref[rp:rp + C0, 0:3]            # (C0, 3): taps (-1, 0, +1)
        bpre = bcol("pre")
        xo_m1 = x_ref[1:2, 0:A]                  # x[2m-1]
        xe_00 = x_ref[0:1, 1:1 + A]              # x[2m]
        xo_00 = x_ref[1:2, 1:1 + A]              # x[2m+1]
        xe_p1 = x_ref[0:1, 2:2 + A]              # x[2m+2]
        he_raw = dot(wpre, jnp.concatenate([xo_m1, xe_00, xo_00], axis=0)) + bpre
        ho_raw = dot(wpre, jnp.concatenate([xe_00, xo_00, xe_p1], axis=0)) + bpre
        store(he, masked(leaky(he_raw)))
        store(ho, masked(leaky(ho_raw)))

        # ---- layer0: two BasicBlocks (C0 -> C0, stride 1, identity shortcut) --
        def conv3_parity(name, e, o):
            w0, w1, w2, b = wmat(name, 0), wmat(name, 1), wmat(name, 2), bcol(name)
            raw_e = dot(w0, sm1(o)) + dot(w1, s00(e)) + dot(w2, s00(o)) + b
            raw_o = dot(w0, s00(e)) + dot(w1, s00(o)) + dot(w2, sp1(e)) + b
            return raw_e, raw_o

        for c1n, c2n in (("a1", "a2"), ("b1", "b2")):
            t_e, t_o = conv3_parity(c1n, he, ho)
            store(te, masked(relu(t_e)))
            store(to, masked(relu(t_o)))
            o_e, o_o = conv3_parity(c2n, te, to)
            out_e = masked(relu(o_e + s00(he)))   # identity shortcut
            out_o = masked(relu(o_o + s00(ho)))
            store(he, out_e)
            store(ho, out_o)

        # ---- layer1 block0: stride-2 conv1 (even-position formula) + 1x1 proj -
        w0, w1, w2, b = wmat("c1", 0), wmat("c1", 1), wmat("c1", 2), bcol("c1")
        store(g2, masked(relu(dot(w0, sm1(ho)) + dot(w1, s00(he))
                              + dot(w2, s00(ho)) + b)))
        shortcut = dot(wmat("cs", 0), s00(he)) + bcol("cs")
        w0, w1, w2, b = wmat("c2", 0), wmat("c2", 1), wmat("c2", 2), bcol("c2")
        store(g1, masked(relu(dot(w0, sm1(g2)) + dot(w1, s00(g2)) + dot(w2, sp1(g2))
                              + b + shortcut)))

        # ---- layer1 block1: stride 1, identity shortcut ------------------------
        w0, w1, w2, b = wmat("d1", 0), wmat("d1", 1), wmat("d1", 2), bcol("d1")
        store(g2, masked(relu(dot(w0, sm1(g1)) + dot(w1, s00(g1))
                              + dot(w2, sp1(g1)) + b)))
        w0, w1, w2, b = wmat("d2", 0), wmat("d2", 1), wmat("d2", 2), bcol("d2")
        store(g1, masked(relu(dot(w0, sm1(g2)) + dot(w1, s00(g2)) + dot(w2, sp1(g2))
                              + b + s00(g1))))

        # ---- output head: conv1x1(pad=1) -> LeakyReLU -> Linear(52,15) -> LeakyReLU
        rh = layout["hx"][0]
        w1x1 = p_ref[rh:rh + 1, 0:C1]                 # (1, C1)
        yfull = leaky(dot(w1x1, g1[...]))             # (1, W); lanes 0..lh+1 of each
        for n in range(N):                            # segment = the 52 conv1x1 outputs
            hd[n:n + 1, :] = yfull[:, n * seg:(n + 1) * seg]
        wd = d_ref[0:seg, :]                          # (seg, n_out); rows >= 52 are zero
        bd = d_ref[seg:seg + 1, :]                    # (1, n_out)
        o_ref[...] = leaky(dot(hd[...], wd) + bd).astype(o_ref.dtype)

    return kernel


# ---------------------------------------------------------------------------
# Wrapper
# ---------------------------------------------------------------------------
@functools.partial(jax.jit, static_argnames=("channels", "seg", "n_out"))
def forward_pallas(x, P, D, *, channels, seg=64, n_out=15):
    C0, C1 = channels
    N, cin, L = x.shape
    assert cin == 1 and L == 100, "kernel specialized to 1-channel length-100 input"
    lh = L // 2                                   # 50 positions per parity / post-stride-2
    assert (seg & (seg - 1)) == 0 and seg >= lh + 3
    layout, n_rows = _param_layout(C0, C1)
    assert P.shape == (n_rows, _PARAM_COLS) and D.shape == (seg + 1, n_out)

    W = N * seg
    # Even/odd parity split of the raw input (tiny, fused under jit):
    #   xeo[0, n*seg + 1 + m] = x[n, 2m],  xeo[1, n*seg + 1 + m] = x[n, 2m+1]
    xs = x[:, 0, :].astype(jnp.float32).reshape(N, lh, 2)
    xeo = jnp.transpose(xs, (2, 0, 1))
    xeo = jnp.pad(xeo, ((0, 0), (0, 0), (1, seg - 1 - lh)))
    xeo = xeo.reshape(2, W)

    kernel = _make_kernel(N, C0, C1, seg, lh, layout)
    out = pl.pallas_call(
        kernel,
        out_shape=jax.ShapeDtypeStruct((N, n_out), x.dtype),
        grid=(1,),   # one fused invocation; all activations resident in VMEM
        in_specs=[
            pl.BlockSpec((2, W), lambda i: (0, 0)),
            pl.BlockSpec(P.shape, lambda i: (0, 0)),
            pl.BlockSpec(D.shape, lambda i: (0, 0)),
        ],
        out_specs=pl.BlockSpec((N, n_out), lambda i: (0, 0)),
        scratch_shapes=[
            pltpu.VMEM((C0, W), jnp.float32),   # he: even-position C0 activations
            pltpu.VMEM((C0, W), jnp.float32),   # ho: odd-position  C0 activations
            pltpu.VMEM((C0, W), jnp.float32),   # te: block temp (even)
            pltpu.VMEM((C0, W), jnp.float32),   # to: block temp (odd)
            pltpu.VMEM((C1, W), jnp.float32),   # g1: C1 activations (length-50 signal)
            pltpu.VMEM((C1, W), jnp.float32),   # g2: C1 temp
            pltpu.VMEM((N, seg), jnp.float32),  # hd: per-sample head rows
        ],
        compiler_params=pltpu.CompilerParams(dimension_semantics=("arbitrary",)),
    )(xeo, P, D)
    return out[:, None, :]   # (N, 1, n_out)


# ---------------------------------------------------------------------------
# Pure-JAX reference (for correctness check)
# ---------------------------------------------------------------------------
def _conv1d_ref(x, w, stride, pad):
    return jax.lax.conv_general_dilated(
        x, w, window_strides=(stride,), padding=[(pad, pad)],
        dimension_numbers=("NCH", "OIH", "NCH"),
    )


def _affine(x, s, b):
    return x * s[None, :, None] + b[None, :, None]


def _leaky_ref(x):
    return jnp.where(x >= 0.0, x, 0.01 * x)


def forward_ref(x, params):
    h = _leaky_ref(_affine(_conv1d_ref(x, params["pre_w"], 1, 1),
                           params["pre_s"], params["pre_b"]))
    for layer in params["layers"]:
        for blk in layer:
            s = blk["stride"]
            t = jnp.maximum(
                _affine(_conv1d_ref(h, blk["w1"], s, 1), blk["s1"], blk["b1"]), 0.0)
            t = _affine(_conv1d_ref(t, blk["w2"], 1, 1), blk["s2"], blk["b2"])
            if "ws" in blk:
                sc = _affine(_conv1d_ref(h, blk["ws"], s, 0), blk["ss"], blk["bs"])
            else:
                sc = h
            h = jnp.maximum(t + sc, 0.0)
    y = _leaky_ref(_conv1d_ref(h, params["c1x1_w"], 1, 1))                  # (N, 1, 52)
    y = _leaky_ref(jnp.einsum("ncl,ol->nco", y, params["dense_w"]) + params["dense_b"])
    return y


# ---------------------------------------------------------------------------
# Deterministic parameter init (synthetic, inference-mode BN folded)
# ---------------------------------------------------------------------------
def init_params(key, channels):
    keys = iter(jax.random.split(key, 64))

    def conv_w(co, ci, k):
        std = (ci * k) ** -0.5
        return std * jax.random.normal(next(keys), (co, ci, k), jnp.float32)

    def bn(c):
        k1, k2, k3, k4 = jax.random.split(next(keys), 4)
        gamma = 1.0 + 0.1 * jax.random.normal(k1, (c,), jnp.float32)
        beta = 0.1 * jax.random.normal(k2, (c,), jnp.float32)
        mean = 0.1 * jax.random.normal(k3, (c,), jnp.float32)
        var = jax.random.uniform(k4, (c,), jnp.float32, 0.5, 1.5)
        scale = gamma / jnp.sqrt(var + 1e-5)
        bias = beta - mean * scale
        return scale, bias

    params = {}
    params["pre_w"] = conv_w(channels[0], 1, 3)
    params["pre_s"], params["pre_b"] = bn(channels[0])

    layers = []
    in_planes = channels[0]
    for i, planes in enumerate(channels):
        level_stride = 1 if i == 0 else 2
        blocks = []
        for b in range(2):  # num_blocks = 2
            s = level_stride if b == 0 else 1
            ip = in_planes if b == 0 else planes
            blk = {"stride": s, "w1": conv_w(planes, ip, 3)}
            blk["s1"], blk["b1"] = bn(planes)
            blk["w2"] = conv_w(planes, planes, 3)
            blk["s2"], blk["b2"] = bn(planes)
            if s != 1 or ip != planes:  # projection shortcut
                blk["ws"] = conv_w(planes, ip, 1)
                blk["ss"], blk["bs"] = bn(planes)
            blocks.append(blk)
        layers.append(blocks)
        in_planes = planes
    params["layers"] = layers

    params["c1x1_w"] = conv_w(1, channels[-1], 1)
    params["dense_w"] = (52 ** -0.5) * jax.random.normal(next(keys), (15, 52), jnp.float32)
    params["dense_b"] = 0.1 * jax.random.normal(next(keys), (15,), jnp.float32)
    return params


# ---------------------------------------------------------------------------
if __name__ == "__main__":
    # channels=(4, 8), levels=2.  Input length 100 so that after the stride-2
    # level the length is 50 and conv1x1(pad=1) yields 52 = Linear in_features.
    channels = (4, 8)
    N, L = 2, 100

    key = jax.random.PRNGKey(0)
    kx, kp = jax.random.split(key)
    x = jax.random.normal(kx, (N, 1, L), jnp.float32)
    params = init_params(kp, channels)

    P, D = pack_params(params, seg=64)
    out = forward_pallas(x, P, D, channels=channels, seg=64, n_out=15)
    out = jax.block_until_ready(out)
    assert out.shape == (N, 1, 15), out.shape

    ref = forward_ref(x, params)
    max_err = float(jnp.max(jnp.abs(out - ref)))
    if not jnp.allclose(out, ref, atol=1e-3, rtol=1e-3):
        raise AssertionError(f"Pallas/ref mismatch, max abs err = {max_err}")

    print("KERNEL_OK")
</pallas_src>

<mosaic_0001>
module attributes {stable_mosaic.version = 11 : i64} {
  func.func @kernel(%arg0: i32, %arg1: memref<2x128xf32, #tpu.memory_space<vmem>>, %arg2: memref<61x32xf32, #tpu.memory_space<vmem>>, %arg3: memref<65x15xf32, #tpu.memory_space<vmem>>, %arg4: memref<2x15xf32, #tpu.memory_space<vmem>>, %arg5: memref<4x128xf32, #tpu.memory_space<vmem>>, %arg6: memref<4x128xf32, #tpu.memory_space<vmem>>, %arg7: memref<4x128xf32, #tpu.memory_space<vmem>>, %arg8: memref<4x128xf32, #tpu.memory_space<vmem>>, %arg9: memref<8x128xf32, #tpu.memory_space<vmem>>, %arg10: memref<8x128xf32, #tpu.memory_space<vmem>>, %arg11: memref<2x64xf32, #tpu.memory_space<vmem>>) attributes {dimension_semantics = [#tpu.dimension_semantics<arbitrary>], iteration_bounds = array<i64: 1>, scalar_prefetch = 0 : i64, scratch_operands = 7 : i64, tpu.core_type = #tpu.core_type<tc>, window_params = [{pipeline_mode = #tpu.pipeline_mode<synchronous>, transform_indices = @transform_0, window_bounds = array<i64: 2, 128>}, {pipeline_mode = #tpu.pipeline_mode<synchronous>, transform_indices = @transform_1, window_bounds = array<i64: 61, 32>}, {pipeline_mode = #tpu.pipeline_mode<synchronous>, transform_indices = @transform_2, window_bounds = array<i64: 65, 15>}, {pipeline_mode = #tpu.pipeline_mode<synchronous>, transform_indices = @transform_3, window_bounds = array<i64: 2, 15>}]} {
    %0 = tpu.iota {dimensions = array<i32: 1>} : vector<1x126xi32>
    %c1_i32 = arith.constant 1 : i32
    %1 = vector.broadcast %c1_i32 : i32 to vector<1x126xi32>
    %2 = arith.addi %0, %1 : vector<1x126xi32>
    %c63_i32 = arith.constant 63 : i32
    %3 = vector.broadcast %c63_i32 : i32 to vector<1x126xi32>
    %4 = arith.andi %2, %3 : vector<1x126xi32>
    %c1_i32_0 = arith.constant 1 : i32
    %5 = vector.broadcast %c1_i32_0 : i32 to vector<1x126xi32>
    %6 = arith.cmpi sge, %4, %5 : vector<1x126xi32>
    %c50_i32 = arith.constant 50 : i32
    %7 = vector.broadcast %c50_i32 : i32 to vector<1x126xi32>
    %8 = arith.cmpi sle, %4, %7 : vector<1x126xi32>
    %9 = arith.andi %6, %8 : vector<1x126xi1>
    %cst = arith.constant 0.000000e+00 : f32
    %10 = vector.broadcast %cst : f32 to vector<4x1xf32>
    %c0 = arith.constant 0 : index
    %c0_1 = arith.constant 0 : index
    %11 = vector.load %arg5[%c0, %c0_1] : memref<4x128xf32, #tpu.memory_space<vmem>>, vector<4x1xf32>
    tpu.vector_store %arg5[%c0, %c0_1], %10 {strides = array<i32>} : memref<4x128xf32, #tpu.memory_space<vmem>>, vector<4x1xf32>,
    %cst_2 = arith.constant 0.000000e+00 : f32
    %12 = vector.broadcast %cst_2 : f32 to vector<4x1xf32>
    %c0_3 = arith.constant 0 : index
    %c0_4 = arith.constant 0 : index
    %13 = vector.load %arg6[%c0_3, %c0_4] : memref<4x128xf32, #tpu.memory_space<vmem>>, vector<4x1xf32>
    tpu.vector_store %arg6[%c0_3, %c0_4], %12 {strides = array<i32>} : memref<4x128xf32, #tpu.memory_space<vmem>>, vector<4x1xf32>,
    %cst_5 = arith.constant 0.000000e+00 : f32
    %14 = vector.broadcast %cst_5 : f32 to vector<4x1xf32>
    %c0_6 = arith.constant 0 : index
    %c0_7 = arith.constant 0 : index
    %15 = vector.load %arg7[%c0_6, %c0_7] : memref<4x128xf32, #tpu.memory_space<vmem>>, vector<4x1xf32>
    tpu.vector_store %arg7[%c0_6, %c0_7], %14 {strides = array<i32>} : memref<4x128xf32, #tpu.memory_space<vmem>>, vector<4x1xf32>,
    %cst_8 = arith.constant 0.000000e+00 : f32
    %16 = vector.broadcast %cst_8 : f32 to vector<4x1xf32>
    %c0_9 = arith.constant 0 : index
    %c0_10 = arith.constant 0 : index
    %17 = vector.load %arg8[%c0_9, %c0_10] : memref<4x128xf32, #tpu.memory_space<vmem>>, vector<4x1xf32>
    tpu.vector_store %arg8[%c0_9, %c0_10], %16 {strides = array<i32>} : memref<4x128xf32, #tpu.memory_space<vmem>>, vector<4x1xf32>,
    %cst_11 = arith.constant 0.000000e+00 : f32
    %18 = vector.broadcast %cst_11 : f32 to vector<8x1xf32>
    %c0_12 = arith.constant 0 : index
    %c0_13 = arith.constant 0 : index
    %19 = vector.load %arg10[%c0_12, %c0_13] : memref<8x128xf32, #tpu.memory_space<vmem>>, vector<8x1xf32>
    tpu.vector_store %arg10[%c0_12, %c0_13], %18 {strides = array<i32>} : memref<8x128xf32, #tpu.memory_space<vmem>>, vector<8x1xf32>,
    %cst_14 = arith.constant 0.000000e+00 : f32
    %20 = vector.broadcast %cst_14 : f32 to vector<8x128xf32>
    %c0_15 = arith.constant 0 : index
    %c0_16 = arith.constant 0 : index
    %21 = vector.load %arg9[%c0_15, %c0_16] : memref<8x128xf32, #tpu.memory_space<vmem>>, vector<8x128xf32>
    tpu.vector_store %arg9[%c0_15, %c0_16], %20 {strides = array<i32>} : memref<8x128xf32, #tpu.memory_space<vmem>>, vector<8x128xf32>,
    %c0_17 = arith.constant 0 : index
    %c0_18 = arith.constant 0 : index
    %22 = vector.load %arg2[%c0_17, %c0_18] : memref<61x32xf32, #tpu.memory_space<vmem>>, vector<4x3xf32>
    %c0_19 = arith.constant 0 : index
    %c3 = arith.constant 3 : index
    %23 = vector.load %arg2[%c0_19, %c3] : memref<61x32xf32, #tpu.memory_space<vmem>>, vector<4x1xf32>
    %c1 = arith.constant 1 : index
    %c0_20 = arith.constant 0 : index
    %24 = vector.load %arg1[%c1, %c0_20] : memref<2x128xf32, #tpu.memory_space<vmem>>, vector<1x126xf32>
    %c0_21 = arith.constant 0 : index
    %c1_22 = arith.constant 1 : index
    %25 = vector.load %arg1[%c0_21, %c1_22] : memref<2x128xf32, #tpu.memory_space<vmem>>, vector<1x126xf32>
    %c1_23 = arith.constant 1 : index
    %c1_24 = arith.constant 1 : index
    %26 = vector.load %arg1[%c1_23, %c1_24] : memref<2x128xf32, #tpu.memory_space<vmem>>, vector<1x126xf32>
    %c0_25 = arith.constant 0 : index
    %c2 = arith.constant 2 : index
    %27 = vector.load %arg1[%c0_25, %c2] : memref<2x128xf32, #tpu.memory_space<vmem>>, vector<1x126xf32>
    %28 = tpu.concatenate %24, %25, %26 in 0 : vector<1x126xf32>, vector<1x126xf32>, vector<1x126xf32> -> vector<3x126xf32>
    %cst_26 = arith.constant dense<0.000000e+00> : vector<4x126xf32>
    %29 = tpu.matmul %22, %28, %cst_26 {dimension_numbers = #tpu.dot_dimension_numbers<[1], [0], [0], [1], [0, 0, 1, 1], [], []>} : vector<4x3xf32>, vector<3x126xf32>, vector<4x126xf32> -> vector<4x126xf32>
    %30 = vector.broadcast %23 : vector<4x1xf32> to vector<4x126xf32>
    %31 = arith.addf %29, %30 : vector<4x126xf32>
    %32 = tpu.concatenate %25, %26, %27 in 0 : vector<1x126xf32>, vector<1x126xf32>, vector<1x126xf32> -> vector<3x126xf32>
    %cst_27 = arith.constant dense<0.000000e+00> : vector<4x126xf32>
    %33 = tpu.matmul %22, %32, %cst_27 {dimension_numbers = #tpu.dot_dimension_numbers<[1], [0], [0], [1], [0, 0, 1, 1], [], []>} : vector<4x3xf32>, vector<3x126xf32>, vector<4x126xf32> -> vector<4x126xf32>
    %34 = vector.broadcast %23 : vector<4x1xf32> to vector<4x126xf32>
    %35 = arith.addf %33, %34 : vector<4x126xf32>
    %cst_28 = arith.constant 0.000000e+00 : f32
    %36 = vector.broadcast %cst_28 : f32 to vector<4x126xf32>
    %37 = arith.cmpf oge, %31, %36 : vector<4x126xf32>
    %cst_29 = arith.constant 0.00999999977 : f32
    %38 = vector.broadcast %cst_29 : f32 to vector<4x126xf32>
    %39 = arith.mulf %38, %31 : vector<4x126xf32>
    %40 = arith.select %37, %31, %39 : vector<4x126xi1>, vector<4x126xf32>
    %cst_30 = arith.constant 0.000000e+00 : f32
    %41 = vector.shape_cast %9 : vector<1x126xi1> to vector<1x126xi1>
    %42 = vector.broadcast %41 : vector<1x126xi1> to vector<4x126xi1>
    %43 = vector.broadcast %cst_30 : f32 to vector<4x126xf32>
    %44 = arith.select %42, %40, %43 : vector<4x126xi1>, vector<4x126xf32>
    %c0_31 = arith.constant 0 : index
    %c1_32 = arith.constant 1 : index
    %45 = vector.load %arg5[%c0_31, %c1_32] : memref<4x128xf32, #tpu.memory_space<vmem>>, vector<4x126xf32>
    tpu.vector_store %arg5[%c0_31, %c1_32], %44 {strides = array<i32>} : memref<4x128xf32, #tpu.memory_space<vmem>>, vector<4x126xf32>,
    %cst_33 = arith.constant 0.000000e+00 : f32
    %46 = vector.broadcast %cst_33 : f32 to vector<4x126xf32>
    %47 = arith.cmpf oge, %35, %46 : vector<4x126xf32>
    %cst_34 = arith.constant 0.00999999977 : f32
    %48 = vector.broadcast %cst_34 : f32 to vector<4x126xf32>
    %49 = arith.mulf %48, %35 : vector<4x126xf32>
    %50 = arith.select %47, %35, %49 : vector<4x126xi1>, vector<4x126xf32>
    %cst_35 = arith.constant 0.000000e+00 : f32
    %51 = vector.shape_cast %9 : vector<1x126xi1> to vector<1x126xi1>
    %52 = vector.broadcast %51 : vector<1x126xi1> to vector<4x126xi1>
    %53 = vector.broadcast %cst_35 : f32 to vector<4x126xf32>
    %54 = arith.select %52, %50, %53 : vector<4x126xi1>, vector<4x126xf32>
    %c0_36 = arith.constant 0 : index
    %c1_37 = arith.constant 1 : index
    %55 = vector.load %arg6[%c0_36, %c1_37] : memref<4x128xf32, #tpu.memory_space<vmem>>, vector<4x126xf32>
    tpu.vector_store %arg6[%c0_36, %c1_37], %54 {strides = array<i32>} : memref<4x128xf32, #tpu.memory_space<vmem>>, vector<4x126xf32>,
    %c4 = arith.constant 4 : index
    %c0_38 = arith.constant 0 : index
    %56 = vector.load %arg2[%c4, %c0_38] : memref<61x32xf32, #tpu.memory_space<vmem>>, vector<4x4xf32>
    %c4_39 = arith.constant 4 : index
    %c4_40 = arith.constant 4 : index
    %57 = vector.load %arg2[%c4_39, %c4_40] : memref<61x32xf32, #tpu.memory_space<vmem>>, vector<4x4xf32>
    %c4_41 = arith.constant 4 : index
    %c8 = arith.constant 8 : index
    %58 = vector.load %arg2[%c4_41, %c8] : memref<61x32xf32, #tpu.memory_space<vmem>>, vector<4x4xf32>
    %c4_42 = arith.constant 4 : index
    %c12 = arith.constant 12 : index
    %59 = vector.load %arg2[%c4_42, %c12] : memref<61x32xf32, #tpu.memory_space<vmem>>, vector<4x1xf32>
    %c0_43 = arith.constant 0 : index
    %c0_44 = arith.constant 0 : index
    %60 = vector.load %arg6[%c0_43, %c0_44] : memref<4x128xf32, #tpu.memory_space<vmem>>, vector<4x126xf32>
    %cst_45 = arith.constant dense<0.000000e+00> : vector<4x126xf32>
    %61 = tpu.matmul %56, %60, %cst_45 {dimension_numbers = #tpu.dot_dimension_numbers<[1], [0], [0], [1], [0, 0, 1, 1], [], []>} : vector<4x4xf32>, vector<4x126xf32>, vector<4x126xf32> -> vector<4x126xf32>
    %c0_46 = arith.constant 0 : index
    %c1_47 = arith.constant 1 : index
    %62 = vector.load %arg5[%c0_46, %c1_47] : memref<4x128xf32, #tpu.memory_space<vmem>>, vector<4x126xf32>
    %cst_48 = arith.constant dense<0.000000e+00> : vector<4x126xf32>
    %63 = tpu.matmul %57, %62, %cst_48 {dimension_numbers = #tpu.dot_dimension_numbers<[1], [0], [0], [1], [0, 0, 1, 1], [], []>} : vector<4x4xf32>, vector<4x126xf32>, vector<4x126xf32> -> vector<4x126xf32>
    %64 = arith.addf %61, %63 : vector<4x126xf32>
    %c0_49 = arith.constant 0 : index
    %c1_50 = arith.constant 1 : index
    %65 = vector.load %arg6[%c0_49, %c1_50] : memref<4x128xf32, #tpu.memory_space<vmem>>, vector<4x126xf32>
    %cst_51 = arith.constant dense<0.000000e+00> : vector<4x126xf32>
    %66 = tpu.matmul %58, %65, %cst_51 {dimension_numbers = #tpu.dot_dimension_numbers<[1], [0], [0], [1], [0, 0, 1, 1], [], []>} : vector<4x4xf32>, vector<4x126xf32>, vector<4x126xf32> -> vector<4x126xf32>
    %67 = arith.addf %64, %66 : vector<4x126xf32>
    %68 = vector.broadcast %59 : vector<4x1xf32> to vector<4x126xf32>
    %69 = arith.addf %67, %68 : vector<4x126xf32>
    %c0_52 = arith.constant 0 : index
    %c1_53 = arith.constant 1 : index
    %70 = vector.load %arg5[%c0_52, %c1_53] : memref<4x128xf32, #tpu.memory_space<vmem>>, vector<4x126xf32>
    %cst_54 = arith.constant dense<0.000000e+00> : vector<4x126xf32>
    %71 = tpu.matmul %56, %70, %cst_54 {dimension_numbers = #tpu.dot_dimension_numbers<[1], [0], [0], [1], [0, 0, 1, 1], [], []>} : vector<4x4xf32>, vector<4x126xf32>, vector<4x126xf32> -> vector<4x126xf32>
    %c0_55 = arith.constant 0 : index
    %c1_56 = arith.constant 1 : index
    %72 = vector.load %arg6[%c0_55, %c1_56] : memref<4x128xf32, #tpu.memory_space<vmem>>, vector<4x126xf32>
    %cst_57 = arith.constant dense<0.000000e+00> : vector<4x126xf32>
    %73 = tpu.matmul %57, %72, %cst_57 {dimension_numbers = #tpu.dot_dimension_numbers<[1], [0], [0], [1], [0, 0, 1, 1], [], []>} : vector<4x4xf32>, vector<4x126xf32>, vector<4x126xf32> -> vector<4x126xf32>
    %74 = arith.addf %71, %73 : vector<4x126xf32>
    %c0_58 = arith.constant 0 : index
    %c2_59 = arith.constant 2 : index
    %75 = vector.load %arg5[%c0_58, %c2_59] : memref<4x128xf32, #tpu.memory_space<vmem>>, vector<4x126xf32>
    %cst_60 = arith.constant dense<0.000000e+00> : vector<4x126xf32>
    %76 = tpu.matmul %58, %75, %cst_60 {dimension_numbers = #tpu.dot_dimension_numbers<[1], [0], [0], [1], [0, 0, 1, 1], [], []>} : vector<4x4xf32>, vector<4x126xf32>, vector<4x126xf32> -> vector<4x126xf32>
    %77 = arith.addf %74, %76 : vector<4x126xf32>
    %78 = vector.broadcast %59 : vector<4x1xf32> to vector<4x126xf32>
    %79 = arith.addf %77, %78 : vector<4x126xf32>
    %cst_61 = arith.constant 0.000000e+00 : f32
    %80 = vector.broadcast %cst_61 : f32 to vector<4x126xf32>
    %81 = arith.maximumf %69, %80 : vector<4x126xf32>
    %cst_62 = arith.constant 0.000000e+00 : f32
    %82 = vector.shape_cast %9 : vector<1x126xi1> to vector<1x126xi1>
    %83 = vector.broadcast %82 : vector<1x126xi1> to vector<4x126xi1>
    %84 = vector.broadcast %cst_62 : f32 to vector<4x126xf32>
    %85 = arith.select %83, %81, %84 : vector<4x126xi1>, vector<4x126xf32>
    %c0_63 = arith.constant 0 : index
    %c1_64 = arith.constant 1 : index
    %86 = vector.load %arg7[%c0_63, %c1_64] : memref<4x128xf32, #tpu.memory_space<vmem>>, vector<4x126xf32>
    tpu.vector_store %arg7[%c0_63, %c1_64], %85 {strides = array<i32>} : memref<4x128xf32, #tpu.memory_space<vmem>>, vector<4x126xf32>,
    %cst_65 = arith.constant 0.000000e+00 : f32
    %87 = vector.broadcast %cst_65 : f32 to vector<4x126xf32>
    %88 = arith.maximumf %79, %87 : vector<4x126xf32>
    %cst_66 = arith.constant 0.000000e+00 : f32
    %89 = vector.shape_cast %9 : vector<1x126xi1> to vector<1x126xi1>
    %90 = vector.broadcast %89 : vector<1x126xi1> to vector<4x126xi1>
    %91 = vector.broadcast %cst_66 : f32 to vector<4x126xf32>
    %92 = arith.select %90, %88, %91 : vector<4x126xi1>, vector<4x126xf32>
    %c0_67 = arith.constant 0 : index
    %c1_68 = arith.constant 1 : index
    %93 = vector.load %arg8[%c0_67, %c1_68] : memref<4x128xf32, #tpu.memory_space<vmem>>, vector<4x126xf32>
    tpu.vector_store %arg8[%c0_67, %c1_68], %92 {strides = array<i32>} : memref<4x128xf32, #tpu.memory_space<vmem>>, vector<4x126xf32>,
    %c8_69 = arith.constant 8 : index
    %c0_70 = arith.constant 0 : index
    %94 = vector.load %arg2[%c8_69, %c0_70] : memref<61x32xf32, #tpu.memory_space<vmem>>, vector<4x4xf32>
    %c8_71 = arith.constant 8 : index
    %c4_72 = arith.constant 4 : index
    %95 = vector.load %arg2[%c8_71, %c4_72] : memref<61x32xf32, #tpu.memory_space<vmem>>, vector<4x4xf32>
    %c8_73 = arith.constant 8 : index
    %c8_74 = arith.constant 8 : index
    %96 = vector.load %arg2[%c8_73, %c8_74] : memref<61x32xf32, #tpu.memory_space<vmem>>, vector<4x4xf32>
    %c8_75 = arith.constant 8 : index
    %c12_76 = arith.constant 12 : index
    %97 = vector.load %arg2[%c8_75, %c12_76] : memref<61x32xf32, #tpu.memory_space<vmem>>, vector<4x1xf32>
    %c0_77 = arith.constant 0 : index
    %c0_78 = arith.constant 0 : index
    %98 = vector.load %arg8[%c0_77, %c0_78] : memref<4x128xf32, #tpu.memory_space<vmem>>, vector<4x126xf32>
    %cst_79 = arith.constant dense<0.000000e+00> : vector<4x126xf32>
    %99 = tpu.matmul %94, %98, %cst_79 {dimension_numbers = #tpu.dot_dimension_numbers<[1], [0], [0], [1], [0, 0, 1, 1], [], []>} : vector<4x4xf32>, vector<4x126xf32>, vector<4x126xf32> -> vector<4x126xf32>
    %c0_80 = arith.constant 0 : index
    %c1_81 = arith.constant 1 : index
    %100 = vector.load %arg7[%c0_80, %c1_81] : memref<4x128xf32, #tpu.memory_space<vmem>>, vector<4x126xf32>
    %cst_82 = arith.constant dense<0.000000e+00> : vector<4x126xf32>
    %101 = tpu.matmul %95, %100, %cst_82 {dimension_numbers = #tpu.dot_dimension_numbers<[1], [0], [0], [1], [0, 0, 1, 1], [], []>} : vector<4x4xf32>, vector<4x126xf32>, vector<4x126xf32> -> vector<4x126xf32>
    %102 = arith.addf %99, %101 : vector<4x126xf32>
    %c0_83 = arith.constant 0 : index
    %c1_84 = arith.constant 1 : index
    %103 = vector.load %arg8[%c0_83, %c1_84] : memref<4x128xf32, #tpu.memory_space<vmem>>, vector<4x126xf32>
    %cst_85 = arith.constant dense<0.000000e+00> : vector<4x126xf32>
    %104 = tpu.matmul %96, %103, %cst_85 {dimension_numbers = #tpu.dot_dimension_numbers<[1], [0], [0], [1], [0, 0, 1, 1], [], []>} : vector<4x4xf32>, vector<4x126xf32>, vector<4x126xf32> -> vector<4x126xf32>
    %105 = arith.addf %102, %104 : vector<4x126xf32>
    %106 = vector.broadcast %97 : vector<4x1xf32> to vector<4x126xf32>
    %107 = arith.addf %105, %106 : vector<4x126xf32>
    %c0_86 = arith.constant 0 : index
    %c1_87 = arith.constant 1 : index
    %108 = vector.load %arg7[%c0_86, %c1_87] : memref<4x128xf32, #tpu.memory_space<vmem>>, vector<4x126xf32>
    %cst_88 = arith.constant dense<0.000000e+00> : vector<4x126xf32>
    %109 = tpu.matmul %94, %108, %cst_88 {dimension_numbers = #tpu.dot_dimension_numbers<[1], [0], [0], [1], [0, 0, 1, 1], [], []>} : vector<4x4xf32>, vector<4x126xf32>, vector<4x126xf32> -> vector<4x126xf32>
    %c0_89 = arith.constant 0 : index
    %c1_90 = arith.constant 1 : index
    %110 = vector.load %arg8[%c0_89, %c1_90] : memref<4x128xf32, #tpu.memory_space<vmem>>, vector<4x126xf32>
    %cst_91 = arith.constant dense<0.000000e+00> : vector<4x126xf32>
    %111 = tpu.matmul %95, %110, %cst_91 {dimension_numbers = #tpu.dot_dimension_numbers<[1], [0], [0], [1], [0, 0, 1, 1], [], []>} : vector<4x4xf32>, vector<4x126xf32>, vector<4x126xf32> -> vector<4x126xf32>
    %112 = arith.addf %109, %111 : vector<4x126xf32>
    %c0_92 = arith.constant 0 : index
    %c2_93 = arith.constant 2 : index
    %113 = vector.load %arg7[%c0_92, %c2_93] : memref<4x128xf32, #tpu.memory_space<vmem>>, vector<4x126xf32>
    %cst_94 = arith.constant dense<0.000000e+00> : vector<4x126xf32>
    %114 = tpu.matmul %96, %113, %cst_94 {dimension_numbers = #tpu.dot_dimension_numbers<[1], [0], [0], [1], [0, 0, 1, 1], [], []>} : vector<4x4xf32>, vector<4x126xf32>, vector<4x126xf32> -> vector<4x126xf32>
    %115 = arith.addf %112, %114 : vector<4x126xf32>
    %116 = vector.broadcast %97 : vector<4x1xf32> to vector<4x126xf32>
    %117 = arith.addf %115, %116 : vector<4x126xf32>
    %c0_95 = arith.constant 0 : index
    %c1_96 = arith.constant 1 : index
    %118 = vector.load %arg5[%c0_95, %c1_96] : memref<4x128xf32, #tpu.memory_space<vmem>>, vector<4x126xf32>
    %119 = arith.addf %107, %118 : vector<4x126xf32>
    %cst_97 = arith.constant 0.000000e+00 : f32
    %120 = vector.broadcast %cst_97 : f32 to vector<4x126xf32>
    %121 = arith.maximumf %119, %120 : vector<4x126xf32>
    %cst_98 = arith.constant 0.000000e+00 : f32
    %122 = vector.shape_cast %9 : vector<1x126xi1> to vector<1x126xi1>
    %123 = vector.broadcast %122 : vector<1x126xi1> to vector<4x126xi1>
    %124 = vector.broadcast %cst_98 : f32 to vector<4x126xf32>
    %125 = arith.select %123, %121, %124 : vector<4x126xi1>, vector<4x126xf32>
    %c0_99 = arith.constant 0 : index
    %c1_100 = arith.constant 1 : index
    %126 = vector.load %arg6[%c0_99, %c1_100] : memref<4x128xf32, #tpu.memory_space<vmem>>, vector<4x126xf32>
    %127 = arith.addf %117, %126 : vector<4x126xf32>
    %cst_101 = arith.constant 0.000000e+00 : f32
    %128 = vector.broadcast %cst_101 : f32 to vector<4x126xf32>
    %129 = arith.maximumf %127, %128 : vector<4x126xf32>
    %cst_102 = arith.constant 0.000000e+00 : f32
    %130 = vector.shape_cast %9 : vector<1x126xi1> to vector<1x126xi1>
    %131 = vector.broadcast %130 : vector<1x126xi1> to vector<4x126xi1>
    %132 = vector.broadcast %cst_102 : f32 to vector<4x126xf32>
    %133 = arith.select %131, %129, %132 : vector<4x126xi1>, vector<4x126xf32>
    %c0_103 = arith.constant 0 : index
    %c1_104 = arith.constant 1 : index
    %134 = vector.load %arg5[%c0_103, %c1_104] : memref<4x128xf32, #tpu.memory_space<vmem>>, vector<4x126xf32>
    tpu.vector_store %arg5[%c0_103, %c1_104], %125 {strides = array<i32>} : memref<4x128xf32, #tpu.memory_space<vmem>>, vector<4x126xf32>,
    %c0_105 = arith.constant 0 : index
    %c1_106 = arith.constant 1 : index
    %135 = vector.load %arg6[%c0_105, %c1_106] : memref<4x128xf32, #tpu.memory_space<vmem>>, vector<4x126xf32>
    tpu.vector_store %arg6[%c0_105, %c1_106], %133 {strides = array<i32>} : memref<4x128xf32, #tpu.memory_space<vmem>>, vector<4x126xf32>,
    %c12_107 = arith.constant 12 : index
    %c0_108 = arith.constant 0 : index
    %136 = vector.load %arg2[%c12_107, %c0_108] : memref<61x32xf32, #tpu.memory_space<vmem>>, vector<4x4xf32>
    %c12_109 = arith.constant 12 : index
    %c4_110 = arith.constant 4 : index
    %137 = vector.load %arg2[%c12_109, %c4_110] : memref<61x32xf32, #tpu.memory_space<vmem>>, vector<4x4xf32>
    %c12_111 = arith.constant 12 : index
    %c8_112 = arith.constant 8 : index
    %138 = vector.load %arg2[%c12_111, %c8_112] : memref<61x32xf32, #tpu.memory_space<vmem>>, vector<4x4xf32>
    %c12_113 = arith.constant 12 : index
    %c12_114 = arith.constant 12 : index
    %139 = vector.load %arg2[%c12_113, %c12_114] : memref<61x32xf32, #tpu.memory_space<vmem>>, vector<4x1xf32>
    %c0_115 = arith.constant 0 : index
    %c0_116 = arith.constant 0 : index
    %140 = vector.load %arg6[%c0_115, %c0_116] : memref<4x128xf32, #tpu.memory_space<vmem>>, vector<4x126xf32>
    %cst_117 = arith.constant dense<0.000000e+00> : vector<4x126xf32>
    %141 = tpu.matmul %136, %140, %cst_117 {dimension_numbers = #tpu.dot_dimension_numbers<[1], [0], [0], [1], [0, 0, 1, 1], [], []>} : vector<4x4xf32>, vector<4x126xf32>, vector<4x126xf32> -> vector<4x126xf32>
    %c0_118 = arith.constant 0 : index
    %c1_119 = arith.constant 1 : index
    %142 = vector.load %arg5[%c0_118, %c1_119] : memref<4x128xf32, #tpu.memory_space<vmem>>, vector<4x126xf32>
    %cst_120 = arith.constant dense<0.000000e+00> : vector<4x126xf32>
    %143 = tpu.matmul %137, %142, %cst_120 {dimension_numbers = #tpu.dot_dimension_numbers<[1], [0], [0], [1], [0, 0, 1, 1], [], []>} : vector<4x4xf32>, vector<4x126xf32>, vector<4x126xf32> -> vector<4x126xf32>
    %144 = arith.addf %141, %143 : vector<4x126xf32>
    %c0_121 = arith.constant 0 : index
    %c1_122 = arith.constant 1 : index
    %145 = vector.load %arg6[%c0_121, %c1_122] : memref<4x128xf32, #tpu.memory_space<vmem>>, vector<4x126xf32>
    %cst_123 = arith.constant dense<0.000000e+00> : vector<4x126xf32>
    %146 = tpu.matmul %138, %145, %cst_123 {dimension_numbers = #tpu.dot_dimension_numbers<[1], [0], [0], [1], [0, 0, 1, 1], [], []>} : vector<4x4xf32>, vector<4x126xf32>, vector<4x126xf32> -> vector<4x126xf32>
    %147 = arith.addf %144, %146 : vector<4x126xf32>
    %148 = vector.broadcast %139 : vector<4x1xf32> to vector<4x126xf32>
    %149 = arith.addf %147, %148 : vector<4x126xf32>
    %c0_124 = arith.constant 0 : index
    %c1_125 = arith.constant 1 : index
    %150 = vector.load %arg5[%c0_124, %c1_125] : memref<4x128xf32, #tpu.memory_space<vmem>>, vector<4x126xf32>
    %cst_126 = arith.constant dense<0.000000e+00> : vector<4x126xf32>
    %151 = tpu.matmul %136, %150, %cst_126 {dimension_numbers = #tpu.dot_dimension_numbers<[1], [0], [0], [1], [0, 0, 1, 1], [], []>} : vector<4x4xf32>, vector<4x126xf32>, vector<4x126xf32> -> vector<4x126xf32>
    %c0_127 = arith.constant 0 : index
    %c1_128 = arith.constant 1 : index
    %152 = vector.load %arg6[%c0_127, %c1_128] : memref<4x128xf32, #tpu.memory_space<vmem>>, vector<4x126xf32>
    %cst_129 = arith.constant dense<0.000000e+00> : vector<4x126xf32>
    %153 = tpu.matmul %137, %152, %cst_129 {dimension_numbers = #tpu.dot_dimension_numbers<[1], [0], [0], [1], [0, 0, 1, 1], [], []>} : vector<4x4xf32>, vector<4x126xf32>, vector<4x126xf32> -> vector<4x126xf32>
    %154 = arith.addf %151, %153 : vector<4x126xf32>
    %c0_130 = arith.constant 0 : index
    %c2_131 = arith.constant 2 : index
    %155 = vector.load %arg5[%c0_130, %c2_131] : memref<4x128xf32, #tpu.memory_space<vmem>>, vector<4x126xf32>
    %cst_132 = arith.constant dense<0.000000e+00> : vector<4x126xf32>
    %156 = tpu.matmul %138, %155, %cst_132 {dimension_numbers = #tpu.dot_dimension_numbers<[1], [0], [0], [1], [0, 0, 1, 1], [], []>} : vector<4x4xf32>, vector<4x126xf32>, vector<4x126xf32> -> vector<4x126xf32>
    %157 = arith.addf %154, %156 : vector<4x126xf32>
    %158 = vector.broadcast %139 : vector<4x1xf32> to vector<4x126xf32>
    %159 = arith.addf %157, %158 : vector<4x126xf32>
    %cst_133 = arith.constant 0.000000e+00 : f32
    %160 = vector.broadcast %cst_133 : f32 to vector<4x126xf32>
    %161 = arith.maximumf %149, %160 : vector<4x126xf32>
    %cst_134 = arith.constant 0.000000e+00 : f32
    %162 = vector.shape_cast %9 : vector<1x126xi1> to vector<1x126xi1>
    %163 = vector.broadcast %162 : vector<1x126xi1> to vector<4x126xi1>
    %164 = vector.broadcast %cst_134 : f32 to vector<4x126xf32>
    %165 = arith.select %163, %161, %164 : vector<4x126xi1>, vector<4x126xf32>
    %c0_135 = arith.constant 0 : index
    %c1_136 = arith.constant 1 : index
    %166 = vector.load %arg7[%c0_135, %c1_136] : memref<4x128xf32, #tpu.memory_space<vmem>>, vector<4x126xf32>
    tpu.vector_store %arg7[%c0_135, %c1_136], %165 {strides = array<i32>} : memref<4x128xf32, #tpu.memory_space<vmem>>, vector<4x126xf32>,
    %cst_137 = arith.constant 0.000000e+00 : f32
    %167 = vector.broadcast %cst_137 : f32 to vector<4x126xf32>
    %168 = arith.maximumf %159, %167 : vector<4x126xf32>
    %cst_138 = arith.constant 0.000000e+00 : f32
    %169 = vector.shape_cast %9 : vector<1x126xi1> to vector<1x126xi1>
    %170 = vector.broadcast %169 : vector<1x126xi1> to vector<4x126xi1>
    %171 = vector.broadcast %cst_138 : f32 to vector<4x126xf32>
    %172 = arith.select %170, %168, %171 : vector<4x126xi1>, vector<4x126xf32>
    %c0_139 = arith.constant 0 : index
    %c1_140 = arith.constant 1 : index
    %173 = vector.load %arg8[%c0_139, %c1_140] : memref<4x128xf32, #tpu.memory_space<vmem>>, vector<4x126xf32>
    tpu.vector_store %arg8[%c0_139, %c1_140], %172 {strides = array<i32>} : memref<4x128xf32, #tpu.memory_space<vmem>>, vector<4x126xf32>,
    %c16 = arith.constant 16 : index
    %c0_141 = arith.constant 0 : index
    %174 = vector.load %arg2[%c16, %c0_141] : memref<61x32xf32, #tpu.memory_space<vmem>>, vector<4x4xf32>
    %c16_142 = arith.constant 16 : index
    %c4_143 = arith.constant 4 : index
    %175 = vector.load %arg2[%c16_142, %c4_143] : memref<61x32xf32, #tpu.memory_space<vmem>>, vector<4x4xf32>
    %c16_144 = arith.constant 16 : index
    %c8_145 = arith.constant 8 : index
    %176 = vector.load %arg2[%c16_144, %c8_145] : memref<61x32xf32, #tpu.memory_space<vmem>>, vector<4x4xf32>
    %c16_146 = arith.constant 16 : index
    %c12_147 = arith.constant 12 : index
    %177 = vector.load %arg2[%c16_146, %c12_147] : memref<61x32xf32, #tpu.memory_space<vmem>>, vector<4x1xf32>
    %c0_148 = arith.constant 0 : index
    %c0_149 = arith.constant 0 : index
    %178 = vector.load %arg8[%c0_148, %c0_149] : memref<4x128xf32, #tpu.memory_space<vmem>>, vector<4x126xf32>
    %cst_150 = arith.constant dense<0.000000e+00> : vector<4x126xf32>
    %179 = tpu.matmul %174, %178, %cst_150 {dimension_numbers = #tpu.dot_dimension_numbers<[1], [0], [0], [1], [0, 0, 1, 1], [], []>} : vector<4x4xf32>, vector<4x126xf32>, vector<4x126xf32> -> vector<4x126xf32>
    %c0_151 = arith.constant 0 : index
    %c1_152 = arith.constant 1 : index
    %180 = vector.load %arg7[%c0_151, %c1_152] : memref<4x128xf32, #tpu.memory_space<vmem>>, vector<4x126xf32>
    %cst_153 = arith.constant dense<0.000000e+00> : vector<4x126xf32>
    %181 = tpu.matmul %175, %180, %cst_153 {dimension_numbers = #tpu.dot_dimension_numbers<[1], [0], [0], [1], [0, 0, 1, 1], [], []>} : vector<4x4xf32>, vector<4x126xf32>, vector<4x126xf32> -> vector<4x126xf32>
    %182 = arith.addf %179, %181 : vector<4x126xf32>
    %c0_154 = arith.constant 0 : index
    %c1_155 = arith.constant 1 : index
    %183 = vector.load %arg8[%c0_154, %c1_155] : memref<4x128xf32, #tpu.memory_space<vmem>>, vector<4x126xf32>
    %cst_156 = arith.constant dense<0.000000e+00> : vector<4x126xf32>
    %184 = tpu.matmul %176, %183, %cst_156 {dimension_numbers = #tpu.dot_dimension_numbers<[1], [0], [0], [1], [0, 0, 1, 1], [], []>} : vector<4x4xf32>, vector<4x126xf32>, vector<4x126xf32> -> vector<4x126xf32>
    %185 = arith.addf %182, %184 : vector<4x126xf32>
    %186 = vector.broadcast %177 : vector<4x1xf32> to vector<4x126xf32>
    %187 = arith.addf %185, %186 : vector<4x126xf32>
    %c0_157 = arith.constant 0 : index
    %c1_158 = arith.constant 1 : index
    %188 = vector.load %arg7[%c0_157, %c1_158] : memref<4x128xf32, #tpu.memory_space<vmem>>, vector<4x126xf32>
    %cst_159 = arith.constant dense<0.000000e+00> : vector<4x126xf32>
    %189 = tpu.matmul %174, %188, %cst_159 {dimension_numbers = #tpu.dot_dimension_numbers<[1], [0], [0], [1], [0, 0, 1, 1], [], []>} : vector<4x4xf32>, vector<4x126xf32>, vector<4x126xf32> -> vector<4x126xf32>
    %c0_160 = arith.constant 0 : index
    %c1_161 = arith.constant 1 : index
    %190 = vector.load %arg8[%c0_160, %c1_161] : memref<4x128xf32, #tpu.memory_space<vmem>>, vector<4x126xf32>
    %cst_162 = arith.constant dense<0.000000e+00> : vector<4x126xf32>
    %191 = tpu.matmul %175, %190, %cst_162 {dimension_numbers = #tpu.dot_dimension_numbers<[1], [0], [0], [1], [0, 0, 1, 1], [], []>} : vector<4x4xf32>, vector<4x126xf32>, vector<4x126xf32> -> vector<4x126xf32>
    %192 = arith.addf %189, %191 : vector<4x126xf32>
    %c0_163 = arith.constant 0 : index
    %c2_164 = arith.constant 2 : index
    %193 = vector.load %arg7[%c0_163, %c2_164] : memref<4x128xf32, #tpu.memory_space<vmem>>, vector<4x126xf32>
    %cst_165 = arith.constant dense<0.000000e+00> : vector<4x126xf32>
    %194 = tpu.matmul %176, %193, %cst_165 {dimension_numbers = #tpu.dot_dimension_numbers<[1], [0], [0], [1], [0, 0, 1, 1], [], []>} : vector<4x4xf32>, vector<4x126xf32>, vector<4x126xf32> -> vector<4x126xf32>
    %195 = arith.addf %192, %194 : vector<4x126xf32>
    %196 = vector.broadcast %177 : vector<4x1xf32> to vector<4x126xf32>
    %197 = arith.addf %195, %196 : vector<4x126xf32>
    %c0_166 = arith.constant 0 : index
    %c1_167 = arith.constant 1 : index
    %198 = vector.load %arg5[%c0_166, %c1_167] : memref<4x128xf32, #tpu.memory_space<vmem>>, vector<4x126xf32>
    %199 = arith.addf %187, %198 : vector<4x126xf32>
    %cst_168 = arith.constant 0.000000e+00 : f32
    %200 = vector.broadcast %cst_168 : f32 to vector<4x126xf32>
    %201 = arith.maximumf %199, %200 : vector<4x126xf32>
    %cst_169 = arith.constant 0.000000e+00 : f32
    %202 = vector.shape_cast %9 : vector<1x126xi1> to vector<1x126xi1>
    %203 = vector.broadcast %202 : vector<1x126xi1> to vector<4x126xi1>
    %204 = vector.broadcast %cst_169 : f32 to vector<4x126xf32>
    %205 = arith.select %203, %201, %204 : vector<4x126xi1>, vector<4x126xf32>
    %c0_170 = arith.constant 0 : index
    %c1_171 = arith.constant 1 : index
    %206 = vector.load %arg6[%c0_170, %c1_171] : memref<4x128xf32, #tpu.memory_space<vmem>>, vector<4x126xf32>
    %207 = arith.addf %197, %206 : vector<4x126xf32>
    %cst_172 = arith.constant 0.000000e+00 : f32
    %208 = vector.broadcast %cst_172 : f32 to vector<4x126xf32>
    %209 = arith.maximumf %207, %208 : vector<4x126xf32>
    %cst_173 = arith.constant 0.000000e+00 : f32
    %210 = vector.shape_cast %9 : vector<1x126xi1> to vector<1x126xi1>
    %211 = vector.broadcast %210 : vector<1x126xi1> to vector<4x126xi1>
    %212 = vector.broadcast %cst_173 : f32 to vector<4x126xf32>
    %213 = arith.select %211, %209, %212 : vector<4x126xi1>, vector<4x126xf32>
    %c0_174 = arith.constant 0 : index
    %c1_175 = arith.constant 1 : index
    %214 = vector.load %arg5[%c0_174, %c1_175] : memref<4x128xf32, #tpu.memory_space<vmem>>, vector<4x126xf32>
    tpu.vector_store %arg5[%c0_174, %c1_175], %205 {strides = array<i32>} : memref<4x128xf32, #tpu.memory_space<vmem>>, vector<4x126xf32>,
    %c0_176 = arith.constant 0 : index
    %c1_177 = arith.constant 1 : index
    %215 = vector.load %arg6[%c0_176, %c1_177] : memref<4x128xf32, #tpu.memory_space<vmem>>, vector<4x126xf32>
    tpu.vector_store %arg6[%c0_176, %c1_177], %213 {strides = array<i32>} : memref<4x128xf32, #tpu.memory_space<vmem>>, vector<4x126xf32>,
    %c20 = arith.constant 20 : index
    %c0_178 = arith.constant 0 : index
    %216 = vector.load %arg2[%c20, %c0_178] : memref<61x32xf32, #tpu.memory_space<vmem>>, vector<8x4xf32>
    %c20_179 = arith.constant 20 : index
    %c4_180 = arith.constant 4 : index
    %217 = vector.load %arg2[%c20_179, %c4_180] : memref<61x32xf32, #tpu.memory_space<vmem>>, vector<8x4xf32>
    %c20_181 = arith.constant 20 : index
    %c8_182 = arith.constant 8 : index
    %218 = vector.load %arg2[%c20_181, %c8_182] : memref<61x32xf32, #tpu.memory_space<vmem>>, vector<8x4xf32>
    %c20_183 = arith.constant 20 : index
    %c12_184 = arith.constant 12 : index
    %219 = vector.load %arg2[%c20_183, %c12_184] : memref<61x32xf32, #tpu.memory_space<vmem>>, vector<8x1xf32>
    %c0_185 = arith.constant 0 : index
    %c0_186 = arith.constant 0 : index
    %220 = vector.load %arg6[%c0_185, %c0_186] : memref<4x128xf32, #tpu.memory_space<vmem>>, vector<4x126xf32>
    %cst_187 = arith.constant dense<0.000000e+00> : vector<8x126xf32>
    %221 = tpu.matmul %216, %220, %cst_187 {dimension_numbers = #tpu.dot_dimension_numbers<[1], [0], [0], [1], [0, 0, 1, 1], [], []>} : vector<8x4xf32>, vector<4x126xf32>, vector<8x126xf32> -> vector<8x126xf32>
    %c0_188 = arith.constant 0 : index
    %c1_189 = arith.constant 1 : index
    %222 = vector.load %arg5[%c0_188, %c1_189] : memref<4x128xf32, #tpu.memory_space<vmem>>, vector<4x126xf32>
    %cst_190 = arith.constant dense<0.000000e+00> : vector<8x126xf32>
    %223 = tpu.matmul %217, %222, %cst_190 {dimension_numbers = #tpu.dot_dimension_numbers<[1], [0], [0], [1], [0, 0, 1, 1], [], []>} : vector<8x4xf32>, vector<4x126xf32>, vector<8x126xf32> -> vector<8x126xf32>
    %224 = arith.addf %221, %223 : vector<8x126xf32>
    %c0_191 = arith.constant 0 : index
    %c1_192 = arith.constant 1 : index
    %225 = vector.load %arg6[%c0_191, %c1_192] : memref<4x128xf32, #tpu.memory_space<vmem>>, vector<4x126xf32>
    %cst_193 = arith.constant dense<0.000000e+00> : vector<8x126xf32>
    %226 = tpu.matmul %218, %225, %cst_193 {dimension_numbers = #tpu.dot_dimension_numbers<[1], [0], [0], [1], [0, 0, 1, 1], [], []>} : vector<8x4xf32>, vector<4x126xf32>, vector<8x126xf32> -> vector<8x126xf32>
    %227 = arith.addf %224, %226 : vector<8x126xf32>
    %228 = vector.broadcast %219 : vector<8x1xf32> to vector<8x126xf32>
    %229 = arith.addf %227, %228 : vector<8x126xf32>
    %cst_194 = arith.constant 0.000000e+00 : f32
    %230 = vector.broadcast %cst_194 : f32 to vector<8x126xf32>
    %231 = arith.maximumf %229, %230 : vector<8x126xf32>
    %cst_195 = arith.constant 0.000000e+00 : f32
    %232 = vector.shape_cast %9 : vector<1x126xi1> to vector<1x126xi1>
    %233 = vector.broadcast %232 : vector<1x126xi1> to vector<8x126xi1>
    %234 = vector.broadcast %cst_195 : f32 to vector<8x126xf32>
    %235 = arith.select %233, %231, %234 : vector<8x126xi1>, vector<8x126xf32>
    %c0_196 = arith.constant 0 : index
    %c1_197 = arith.constant 1 : index
    %236 = vector.load %arg10[%c0_196, %c1_197] : memref<8x128xf32, #tpu.memory_space<vmem>>, vector<8x126xf32>
    tpu.vector_store %arg10[%c0_196, %c1_197], %235 {strides = array<i32>} : memref<8x128xf32, #tpu.memory_space<vmem>>, vector<8x126xf32>,
    %c28 = arith.constant 28 : index
    %c0_198 = arith.constant 0 : index
    %237 = vector.load %arg2[%c28, %c0_198] : memref<61x32xf32, #tpu.memory_space<vmem>>, vector<8x4xf32>
    %c0_199 = arith.constant 0 : index
    %c1_200 = arith.constant 1 : index
    %238 = vector.load %arg5[%c0_199, %c1_200] : memref<4x128xf32, #tpu.memory_space<vmem>>, vector<4x126xf32>
    %cst_201 = arith.constant dense<0.000000e+00> : vector<8x126xf32>
    %239 = tpu.matmul %237, %238, %cst_201 {dimension_numbers = #tpu.dot_dimension_numbers<[1], [0], [0], [1], [0, 0, 1, 1], [], []>} : vector<8x4xf32>, vector<4x126xf32>, vector<8x126xf32> -> vector<8x126xf32>
    %c28_202 = arith.constant 28 : index
    %c4_203 = arith.constant 4 : index
    %240 = vector.load %arg2[%c28_202, %c4_203] : memref<61x32xf32, #tpu.memory_space<vmem>>, vector<8x1xf32>
    %241 = vector.broadcast %240 : vector<8x1xf32> to vector<8x126xf32>
    %242 = arith.addf %239, %241 : vector<8x126xf32>
    %c36 = arith.constant 36 : index
    %c0_204 = arith.constant 0 : index
    %243 = vector.load %arg2[%c36, %c0_204] : memref<61x32xf32, #tpu.memory_space<vmem>>, vector<8x8xf32>
    %c36_205 = arith.constant 36 : index
    %c8_206 = arith.constant 8 : index
    %244 = vector.load %arg2[%c36_205, %c8_206] : memref<61x32xf32, #tpu.memory_space<vmem>>, vector<8x8xf32>
    %c36_207 = arith.constant 36 : index
    %c16_208 = arith.constant 16 : index
    %245 = vector.load %arg2[%c36_207, %c16_208] : memref<61x32xf32, #tpu.memory_space<vmem>>, vector<8x8xf32>
    %c36_209 = arith.constant 36 : index
    %c24 = arith.constant 24 : index
    %246 = vector.load %arg2[%c36_209, %c24] : memref<61x32xf32, #tpu.memory_space<vmem>>, vector<8x1xf32>
    %c0_210 = arith.constant 0 : index
    %c0_211 = arith.constant 0 : index
    %247 = vector.load %arg10[%c0_210, %c0_211] : memref<8x128xf32, #tpu.memory_space<vmem>>, vector<8x126xf32>
    %cst_212 = arith.constant dense<0.000000e+00> : vector<8x126xf32>
    %248 = tpu.matmul %243, %247, %cst_212 {dimension_numbers = #tpu.dot_dimension_numbers<[1], [0], [0], [1], [0, 0, 1, 1], [], []>} : vector<8x8xf32>, vector<8x126xf32>, vector<8x126xf32> -> vector<8x126xf32>
    %c0_213 = arith.constant 0 : index
    %c1_214 = arith.constant 1 : index
    %249 = vector.load %arg10[%c0_213, %c1_214] : memref<8x128xf32, #tpu.memory_space<vmem>>, vector<8x126xf32>
    %cst_215 = arith.constant dense<0.000000e+00> : vector<8x126xf32>
    %250 = tpu.matmul %244, %249, %cst_215 {dimension_numbers = #tpu.dot_dimension_numbers<[1], [0], [0], [1], [0, 0, 1, 1], [], []>} : vector<8x8xf32>, vector<8x126xf32>, vector<8x126xf32> -> vector<8x126xf32>
    %251 = arith.addf %248, %250 : vector<8x126xf32>
    %c0_216 = arith.constant 0 : index
    %c2_217 = arith.constant 2 : index
    %252 = vector.load %arg10[%c0_216, %c2_217] : memref<8x128xf32, #tpu.memory_space<vmem>>, vector<8x126xf32>
    %cst_218 = arith.constant dense<0.000000e+00> : vector<8x126xf32>
    %253 = tpu.matmul %245, %252, %cst_218 {dimension_numbers = #tpu.dot_dimension_numbers<[1], [0], [0], [1], [0, 0, 1, 1], [], []>} : vector<8x8xf32>, vector<8x126xf32>, vector<8x126xf32> -> vector<8x126xf32>
    %254 = arith.addf %251, %253 : vector<8x126xf32>
    %255 = vector.broadcast %246 : vector<8x1xf32> to vector<8x126xf32>
    %256 = arith.addf %254, %255 : vector<8x126xf32>
    %257 = arith.addf %256, %242 : vector<8x126xf32>
    %cst_219 = arith.constant 0.000000e+00 : f32
    %258 = vector.broadcast %cst_219 : f32 to vector<8x126xf32>
    %259 = arith.maximumf %257, %258 : vector<8x126xf32>
    %cst_220 = arith.constant 0.000000e+00 : f32
    %260 = vector.shape_cast %9 : vector<1x126xi1> to vector<1x126xi1>
    %261 = vector.broadcast %260 : vector<1x126xi1> to vector<8x126xi1>
    %262 = vector.broadcast %cst_220 : f32 to vector<8x126xf32>
    %263 = arith.select %261, %259, %262 : vector<8x126xi1>, vector<8x126xf32>
    %c0_221 = arith.constant 0 : index
    %c1_222 = arith.constant 1 : index
    %264 = vector.load %arg9[%c0_221, %c1_222] : memref<8x128xf32, #tpu.memory_space<vmem>>, vector<8x126xf32>
    tpu.vector_store %arg9[%c0_221, %c1_222], %263 {strides = array<i32>} : memref<8x128xf32, #tpu.memory_space<vmem>>, vector<8x126xf32>,
    %c44 = arith.constant 44 : index
    %c0_223 = arith.constant 0 : index
    %265 = vector.load %arg2[%c44, %c0_223] : memref<61x32xf32, #tpu.memory_space<vmem>>, vector<8x8xf32>
    %c44_224 = arith.constant 44 : index
    %c8_225 = arith.constant 8 : index
    %266 = vector.load %arg2[%c44_224, %c8_225] : memref<61x32xf32, #tpu.memory_space<vmem>>, vector<8x8xf32>
    %c44_226 = arith.constant 44 : index
    %c16_227 = arith.constant 16 : index
    %267 = vector.load %arg2[%c44_226, %c16_227] : memref<61x32xf32, #tpu.memory_space<vmem>>, vector<8x8xf32>
    %c44_228 = arith.constant 44 : index
    %c24_229 = arith.constant 24 : index
    %268 = vector.load %arg2[%c44_228, %c24_229] : memref<61x32xf32, #tpu.memory_space<vmem>>, vector<8x1xf32>
    %c0_230 = arith.constant 0 : index
    %c0_231 = arith.constant 0 : index
    %269 = vector.load %arg9[%c0_230, %c0_231] : memref<8x128xf32, #tpu.memory_space<vmem>>, vector<8x126xf32>
    %cst_232 = arith.constant dense<0.000000e+00> : vector<8x126xf32>
    %270 = tpu.matmul %265, %269, %cst_232 {dimension_numbers = #tpu.dot_dimension_numbers<[1], [0], [0], [1], [0, 0, 1, 1], [], []>} : vector<8x8xf32>, vector<8x126xf32>, vector<8x126xf32> -> vector<8x126xf32>
    %c0_233 = arith.constant 0 : index
    %c1_234 = arith.constant 1 : index
    %271 = vector.load %arg9[%c0_233, %c1_234] : memref<8x128xf32, #tpu.memory_space<vmem>>, vector<8x126xf32>
    %cst_235 = arith.constant dense<0.000000e+00> : vector<8x126xf32>
    %272 = tpu.matmul %266, %271, %cst_235 {dimension_numbers = #tpu.dot_dimension_numbers<[1], [0], [0], [1], [0, 0, 1, 1], [], []>} : vector<8x8xf32>, vector<8x126xf32>, vector<8x126xf32> -> vector<8x126xf32>
    %273 = arith.addf %270, %272 : vector<8x126xf32>
    %c0_236 = arith.constant 0 : index
    %c2_237 = arith.constant 2 : index
    %274 = vector.load %arg9[%c0_236, %c2_237] : memref<8x128xf32, #tpu.memory_space<vmem>>, vector<8x126xf32>
    %cst_238 = arith.constant dense<0.000000e+00> : vector<8x126xf32>
    %275 = tpu.matmul %267, %274, %cst_238 {dimension_numbers = #tpu.dot_dimension_numbers<[1], [0], [0], [1], [0, 0, 1, 1], [], []>} : vector<8x8xf32>, vector<8x126xf32>, vector<8x126xf32> -> vector<8x126xf32>
    %276 = arith.addf %273, %275 : vector<8x126xf32>
    %277 = vector.broadcast %268 : vector<8x1xf32> to vector<8x126xf32>
    %278 = arith.addf %276, %277 : vector<8x126xf32>
    %cst_239 = arith.constant 0.000000e+00 : f32
    %279 = vector.broadcast %cst_239 : f32 to vector<8x126xf32>
    %280 = arith.maximumf %278, %279 : vector<8x126xf32>
    %cst_240 = arith.constant 0.000000e+00 : f32
    %281 = vector.shape_cast %9 : vector<1x126xi1> to vector<1x126xi1>
    %282 = vector.broadcast %281 : vector<1x126xi1> to vector<8x126xi1>
    %283 = vector.broadcast %cst_240 : f32 to vector<8x126xf32>
    %284 = arith.select %282, %280, %283 : vector<8x126xi1>, vector<8x126xf32>
    %c0_241 = arith.constant 0 : index
    %c1_242 = arith.constant 1 : index
    %285 = vector.load %arg10[%c0_241, %c1_242] : memref<8x128xf32, #tpu.memory_space<vmem>>, vector<8x126xf32>
    tpu.vector_store %arg10[%c0_241, %c1_242], %284 {strides = array<i32>} : memref<8x128xf32, #tpu.memory_space<vmem>>, vector<8x126xf32>,
    %c52 = arith.constant 52 : index
    %c0_243 = arith.constant 0 : index
    %286 = vector.load %arg2[%c52, %c0_243] : memref<61x32xf32, #tpu.memory_space<vmem>>, vector<8x8xf32>
    %c52_244 = arith.constant 52 : index
    %c8_245 = arith.constant 8 : index
    %287 = vector.load %arg2[%c52_244, %c8_245] : memref<61x32xf32, #tpu.memory_space<vmem>>, vector<8x8xf32>
    %c52_246 = arith.constant 52 : index
    %c16_247 = arith.constant 16 : index
    %288 = vector.load %arg2[%c52_246, %c16_247] : memref<61x32xf32, #tpu.memory_space<vmem>>, vector<8x8xf32>
    %c52_248 = arith.constant 52 : index
    %c24_249 = arith.constant 24 : index
    %289 = vector.load %arg2[%c52_248, %c24_249] : memref<61x32xf32, #tpu.memory_space<vmem>>, vector<8x1xf32>
    %c0_250 = arith.constant 0 : index
    %c0_251 = arith.constant 0 : index
    %290 = vector.load %arg10[%c0_250, %c0_251] : memref<8x128xf32, #tpu.memory_space<vmem>>, vector<8x126xf32>
    %cst_252 = arith.constant dense<0.000000e+00> : vector<8x126xf32>
    %291 = tpu.matmul %286, %290, %cst_252 {dimension_numbers = #tpu.dot_dimension_numbers<[1], [0], [0], [1], [0, 0, 1, 1], [], []>} : vector<8x8xf32>, vector<8x126xf32>, vector<8x126xf32> -> vector<8x126xf32>
    %c0_253 = arith.constant 0 : index
    %c1_254 = arith.constant 1 : index
    %292 = vector.load %arg10[%c0_253, %c1_254] : memref<8x128xf32, #tpu.memory_space<vmem>>, vector<8x126xf32>
    %cst_255 = arith.constant dense<0.000000e+00> : vector<8x126xf32>
    %293 = tpu.matmul %287, %292, %cst_255 {dimension_numbers = #tpu.dot_dimension_numbers<[1], [0], [0], [1], [0, 0, 1, 1], [], []>} : vector<8x8xf32>, vector<8x126xf32>, vector<8x126xf32> -> vector<8x126xf32>
    %294 = arith.addf %291, %293 : vector<8x126xf32>
    %c0_256 = arith.constant 0 : index
    %c2_257 = arith.constant 2 : index
    %295 = vector.load %arg10[%c0_256, %c2_257] : memref<8x128xf32, #tpu.memory_space<vmem>>, vector<8x126xf32>
    %cst_258 = arith.constant dense<0.000000e+00> : vector<8x126xf32>
    %296 = tpu.matmul %288, %295, %cst_258 {dimension_numbers = #tpu.dot_dimension_numbers<[1], [0], [0], [1], [0, 0, 1, 1], [], []>} : vector<8x8xf32>, vector<8x126xf32>, vector<8x126xf32> -> vector<8x126xf32>
    %297 = arith.addf %294, %296 : vector<8x126xf32>
    %298 = vector.broadcast %289 : vector<8x1xf32> to vector<8x126xf32>
    %299 = arith.addf %297, %298 : vector<8x126xf32>
    %c0_259 = arith.constant 0 : index
    %c1_260 = arith.constant 1 : index
    %300 = vector.load %arg9[%c0_259, %c1_260] : memref<8x128xf32, #tpu.memory_space<vmem>>, vector<8x126xf32>
    %301 = arith.addf %299, %300 : vector<8x126xf32>
    %cst_261 = arith.constant 0.000000e+00 : f32
    %302 = vector.broadcast %cst_261 : f32 to vector<8x126xf32>
    %303 = arith.maximumf %301, %302 : vector<8x126xf32>
    %cst_262 = arith.constant 0.000000e+00 : f32
    %304 = vector.shape_cast %9 : vector<1x126xi1> to vector<1x126xi1>
    %305 = vector.broadcast %304 : vector<1x126xi1> to vector<8x126xi1>
    %306 = vector.broadcast %cst_262 : f32 to vector<8x126xf32>
    %307 = arith.select %305, %303, %306 : vector<8x126xi1>, vector<8x126xf32>
    %c0_263 = arith.constant 0 : index
    %c1_264 = arith.constant 1 : index
    %308 = vector.load %arg9[%c0_263, %c1_264] : memref<8x128xf32, #tpu.memory_space<vmem>>, vector<8x126xf32>
    tpu.vector_store %arg9[%c0_263, %c1_264], %307 {strides = array<i32>} : memref<8x128xf32, #tpu.memory_space<vmem>>, vector<8x126xf32>,
    %c60 = arith.constant 60 : index
    %c0_265 = arith.constant 0 : index
    %309 = vector.load %arg2[%c60, %c0_265] : memref<61x32xf32, #tpu.memory_space<vmem>>, vector<1x8xf32>
    %c0_266 = arith.constant 0 : index
    %c0_267 = arith.constant 0 : index
    %310 = vector.load %arg9[%c0_266, %c0_267] : memref<8x128xf32, #tpu.memory_space<vmem>>, vector<8x128xf32>
    %cst_268 = arith.constant dense<0.000000e+00> : vector<1x128xf32>
    %311 = tpu.matmul %309, %310, %cst_268 {dimension_numbers = #tpu.dot_dimension_numbers<[1], [0], [0], [1], [0, 0, 1, 1], [], []>} : vector<1x8xf32>, vector<8x128xf32>, vector<1x128xf32> -> vector<1x128xf32>
    %cst_269 = arith.constant 0.000000e+00 : f32
    %312 = vector.broadcast %cst_269 : f32 to vector<1x128xf32>
    %313 = arith.cmpf oge, %311, %312 : vector<1x128xf32>
    %cst_270 = arith.constant 0.00999999977 : f32
    %314 = vector.broadcast %cst_270 : f32 to vector<1x128xf32>
    %315 = arith.mulf %314, %311 : vector<1x128xf32>
    %316 = arith.select %313, %311, %315 : vector<1x128xi1>, vector<1x128xf32>
    %317 = vector.extract_strided_slice %316 {offsets = [0, 0], sizes = [1, 64], strides = [1, 1]} : vector<1x128xf32> to vector<1x64xf32>
    %c0_271 = arith.constant 0 : index
    %c0_272 = arith.constant 0 : index
    %318 = vector.load %arg11[%c0_271, %c0_272] : memref<2x64xf32, #tpu.memory_space<vmem>>, vector<1x64xf32>
    tpu.vector_store %arg11[%c0_271, %c0_272], %317 {strides = array<i32>} : memref<2x64xf32, #tpu.memory_space<vmem>>, vector<1x64xf32>,
    %319 = vector.extract_strided_slice %316 {offsets = [0, 64], sizes = [1, 64], strides = [1, 1]} : vector<1x128xf32> to vector<1x64xf32>
    %c1_273 = arith.constant 1 : index
    %c0_274 = arith.constant 0 : index
    %320 = vector.load %arg11[%c1_273, %c0_274] : memref<2x64xf32, #tpu.memory_space<vmem>>, vector<1x64xf32>
    tpu.vector_store %arg11[%c1_273, %c0_274], %319 {strides = array<i32>} : memref<2x64xf32, #tpu.memory_space<vmem>>, vector<1x64xf32>,
    %c0_275 = arith.constant 0 : index
    %c0_276 = arith.constant 0 : index
    %321 = vector.load %arg3[%c0_275, %c0_276] : memref<65x15xf32, #tpu.memory_space<vmem>>, vector<64x15xf32>
    %c64 = arith.constant 64 : index
    %c0_277 = arith.constant 0 : index
    %322 = vector.load %arg3[%c64, %c0_277] : memref<65x15xf32, #tpu.memory_space<vmem>>, vector<1x15xf32>
    %c0_278 = arith.constant 0 : index
    %c0_279 = arith.constant 0 : index
    %323 = vector.load %arg11[%c0_278, %c0_279] : memref<2x64xf32, #tpu.memory_space<vmem>>, vector<2x64xf32>
    %cst_280 = arith.constant dense<0.000000e+00> : vector<2x15xf32>
    %324 = tpu.matmul %323, %321, %cst_280 {dimension_numbers = #tpu.dot_dimension_numbers<[1], [0], [0], [1], [0, 0, 1, 1], [], []>} : vector<2x64xf32>, vector<64x15xf32>, vector<2x15xf32> -> vector<2x15xf32>
    %325 = vector.broadcast %322 : vector<1x15xf32> to vector<2x15xf32>
    %326 = arith.addf %324, %325 : vector<2x15xf32>
    %cst_281 = arith.constant 0.000000e+00 : f32
    %327 = vector.broadcast %cst_281 : f32 to vector<2x15xf32>
    %328 = arith.cmpf oge, %326, %327 : vector<2x15xf32>
    %cst_282 = arith.constant 0.00999999977 : f32
    %329 = vector.broadcast %cst_282 : f32 to vector<2x15xf32>
    %330 = arith.mulf %329, %326 : vector<2x15xf32>
    %331 = arith.select %328, %326, %330 : vector<2x15xi1>, vector<2x15xf32>
    %c0_283 = arith.constant 0 : index
    %c0_284 = arith.constant 0 : index
    %332 = vector.load %arg4[%c0_283, %c0_284] : memref<2x15xf32, #tpu.memory_space<vmem>>, vector<2x15xf32>
    tpu.vector_store %arg4[%c0_283, %c0_284], %331 {strides = array<i32>} : memref<2x15xf32, #tpu.memory_space<vmem>>, vector<2x15xf32>,
    return
  }
  func.func @transform_0(%arg0: i32) -> (i32, i32) {
    %c0_i32 = arith.constant 0 : i32
    %c0_i32_0 = arith.constant 0 : i32
    %c0_i32_1 = arith.constant 0 : i32
    return %c0_i32, %c0_i32_0 : i32, i32
  }
  func.func @transform_1(%arg0: i32) -> (i32, i32) {
    %c0_i32 = arith.constant 0 : i32
    %c0_i32_0 = arith.constant 0 : i32
    %c0_i32_1 = arith.constant 0 : i32
    return %c0_i32, %c0_i32_0 : i32, i32
  }
  func.func @transform_2(%arg0: i32) -> (i32, i32) {
    %c0_i32 = arith.constant 0 : i32
    %c0_i32_0 = arith.constant 0 : i32
    %c0_i32_1 = arith.constant 0 : i32
    return %c0_i32, %c0_i32_0 : i32, i32
  }
  func.func @transform_3(%arg0: i32) -> (i32, i32) {
    %c0_i32 = arith.constant 0 : i32
    %c0_i32_0 = arith.constant 0 : i32
    %c0_i32_1 = arith.constant 0 : i32
    return %c0_i32, %c0_i32_0 : i32, i32
  }
}

</mosaic_0001>

<llo_original>
// kernel: squeeze.1
$region0: #{squeeze.1}
  %s0 = inlined_call_operand.vmem [shape: f32[2,100], index: 0, kind: input, shape index: {}]
  %s1 = inlined_call_operand.vmem [shape: f32[2,50,2], index: 1, kind: output, shape index: {}]
  $region1: #{squeeze.1} parent=0
    #allocation0 [shape = 'u8[4096]{0}', space=vmem, size = 0x1000, scoped, tag = 'scoped mem for input reshape']
    %s3 = ssub.s32 4, 1
    %v4 = vld [vmem:[%s0] sm:%s3]
    %5 = vst [vmem:[#allocation0] sm:%s3] %v4
    %v6 = vld [vmem:[#allocation0] sm:$0x3]
    %vm7 = vcmask 15360
    %8 = vst.msk [vmem:[%s1] ss:$56 sm:$0x3] %vm7, %v6
    %v9 = vld [vmem:[#allocation0] sm:$0x3]
    %10 = vrot.lane.b32.xlu0 %v9, 126
    %v11 = vpop.permute.xlu0 %10
    %vm12 = vcmask 15360
    %s13 = scalar_lea.vmem %s1, 1
    %14 = vst.msk [vmem:[%s13] ss:$56 sm:$0x3] %vm12, %v11
    %v15 = vld [vmem:[#allocation0] sm:$0x3]
    %16 = vrot.lane.b32.xlu0 %v15, 124
    %v17 = vpop.permute.xlu0 %16
    %vm18 = vcmask 15360
    %s19 = scalar_lea.vmem %s1, 2
    %20 = vst.msk [vmem:[%s19] ss:$56 sm:$0x3] %vm18, %v17
    %v21 = vld [vmem:[#allocation0] sm:$0x3]
    %22 = vrot.lane.b32.xlu0 %v21, 122
    %v23 = vpop.permute.xlu0 %22
    %vm24 = vcmask 15360
    %s25 = scalar_lea.vmem %s1, 3
    %26 = vst.msk [vmem:[%s25] ss:$56 sm:$0x3] %vm24, %v23
    %v27 = vld [vmem:[#allocation0] sm:$0x3]
    %28 = vrot.lane.b32.xlu0 %v27, 120
    %v29 = vpop.permute.xlu0 %28
    %vm30 = vcmask 15360
    %s31 = scalar_lea.vmem %s1, 4
    %32 = vst.msk [vmem:[%s31] ss:$56 sm:$0x3] %vm30, %v29
    %v33 = vld [vmem:[#allocation0] sm:$0x3]
    %34 = vrot.lane.b32.xlu0 %v33, 118
    %v35 = vpop.permute.xlu0 %34
    %vm36 = vcmask 15360
    %s37 = scalar_lea.vmem %s1, 5
    %38 = vst.msk [vmem:[%s37] ss:$56 sm:$0x3] %vm36, %v35
    %v39 = vld [vmem:[#allocation0] sm:$0x3]
    %40 = vrot.lane.b32.xlu0 %v39, 116
    %v41 = vpop.permute.xlu0 %40
    %vm42 = vcmask 15360
    %s43 = scalar_lea.vmem %s1, 6
    %44 = vst.msk [vmem:[%s43] ss:$56 sm:$0x3] %vm42, %v41
    %v45 = vld [vmem:[#allocation0] sm:$0x3]
    %46 = vrot.lane.b32.xlu0 %v45, 114
    %v47 = vpop.permute.xlu0 %46
    %vm48 = vcmask 15360
    %s49 = scalar_lea.vmem %s1, 7
    %50 = vst.msk [vmem:[%s49] ss:$56 sm:$0x3] %vm48, %v47
    %s51 = scalar_lea.vmem [#allocation0], 1
    %s52 = smov 3
    %v53 = vld [vmem:[%s51] ss:$-1 sm:%s52]
    %54 = vrot.lane.b32.xlu0 %v53, 112
    %v55 = vpop.permute.xlu0 %54
    %vm56 = vcmask 15360
    %s57 = scalar_lea.vmem %s1, 64
    %58 = vst.msk [vmem:[%s57] ss:$-56 sm:$0x3] %vm56, %v55
    %s59 = scalar_lea.vmem [#allocation0], 1
    %s60 = smov 3
    %v61 = vld [vmem:[%s59] ss:$-1 sm:%s60]
    %62 = vrot.lane.b32.xlu0 %v61, 110
    %v63 = vpop.permute.xlu0 %62
    %vm64 = vcmask 15360
    %s65 = scalar_lea.vmem %s1, 65
    %66 = vst.msk [vmem:[%s65] ss:$-56 sm:$0x3] %vm64, %v63
    %s67 = scalar_lea.vmem [#allocation0], 1
    %s68 = smov 3
    %v69 = vld [vmem:[%s67] ss:$-1 sm:%s68]
    %70 = vrot.lane.b32.xlu0 %v69, 108
    %v71 = vpop.permute.xlu0 %70
    %vm72 = vcmask 15360
    %s73 = scalar_lea.vmem %s1, 66
    %74 = vst.msk [vmem:[%s73] ss:$-56 sm:$0x3] %vm72, %v71
    %s75 = scalar_lea.vmem [#allocation0], 1
    %s76 = smov 3
    %v77 = vld [vmem:[%s75] ss:$-1 sm:%s76]
    %78 = vrot.lane.b32.xlu0 %v77, 106
    %v79 = vpop.permute.xlu0 %78
    %vm80 = vcmask 15360
    %s81 = scalar_lea.vmem %s1, 67
    %82 = vst.msk [vmem:[%s81] ss:$-56 sm:$0x3] %vm80, %v79
    %s83 = scalar_lea.vmem [#allocation0], 1
    %s84 = smov 3
    %v85 = vld [vmem:[%s83] ss:$-1 sm:%s84]
    %86 = vrot.lane.b32.xlu0 %v85, 104
    %v87 = vpop.permute.xlu0 %86
    %vm88 = vcmask 15360
    %s89 = scalar_lea.vmem %s1, 68
    %90 = vst.msk [vmem:[%s89] ss:$-56 sm:$0x3] %vm88, %v87
    %s91 = scalar_lea.vmem [#allocation0], 1
    %s92 = smov 3
    %v93 = vld [vmem:[%s91] ss:$-1 sm:%s92]
    %94 = vrot.lane.b32.xlu0 %v93, 102
    %v95 = vpop.permute.xlu0 %94
    %vm96 = vcmask 15360
    %s97 = scalar_lea.vmem %s1, 69
    %98 = vst.msk [vmem:[%s97] ss:$-56 sm:$0x3] %vm96, %v95
    %s99 = scalar_lea.vmem [#allocation0], 1
    %s100 = smov 3
    %v101 = vld [vmem:[%s99] ss:$-1 sm:%s100]
    %102 = vrot.lane.b32.xlu0 %v101, 100
    %v103 = vpop.permute.xlu0 %102
    %vm104 = vcmask 15360
    %s105 = scalar_lea.vmem %s1, 70
    %106 = vst.msk [vmem:[%s105] ss:$-56 sm:$0x3] %vm104, %v103
    %s107 = scalar_lea.vmem [#allocation0], 1
    %s108 = smov 3
    %v109 = vld [vmem:[%s107] ss:$-1 sm:%s108]
    %110 = vrot.lane.b32.xlu0 %v109, 98
    %v111 = vpop.permute.xlu0 %110
    %vm112 = vcmask 15360
    %s113 = scalar_lea.vmem %s1, 71
    %114 = vst.msk [vmem:[%s113] ss:$-56 sm:$0x3] %vm112, %v111
    %s115 = scalar_lea.vmem [#allocation0], 1
    %s116 = smov 3
    %v117 = vld [vmem:[%s115] ss:$-1 sm:%s116]
    %118 = vrot.lane.b32.xlu0 %v117, 96
    %v119 = vpop.permute.xlu0 %118
    %vm120 = vcmask 15360
    %s121 = scalar_lea.vmem %s1, 72
    %122 = vst.msk [vmem:[%s121] ss:$-56 sm:$0x3] %vm120, %v119
    %s123 = scalar_lea.vmem [#allocation0], 1
    %s124 = smov 3
    %v125 = vld [vmem:[%s123] ss:$-1 sm:%s124]
    %126 = vrot.lane.b32.xlu0 %v125, 94
    %v127 = vpop.permute.xlu0 %126
    %vm128 = vcmask 15360
    %s129 = scalar_lea.vmem %s1, 73
    %130 = vst.msk [vmem:[%s129] ss:$-56 sm:$0x3] %vm128, %v127
    %s131 = scalar_lea.vmem [#allocation0], 1
    %s132 = smov 3
    %v133 = vld [vmem:[%s131] ss:$-1 sm:%s132]
    %134 = vrot.lane.b32.xlu0 %v133, 92
    %v135 = vpop.permute.xlu0 %134
    %vm136 = vcmask 15360
    %s137 = scalar_lea.vmem %s1, 74
    %138 = vst.msk [vmem:[%s137] ss:$-56 sm:$0x3] %vm136, %v135
    %s139 = scalar_lea.vmem [#allocation0], 1
    %s140 = smov 3
    %v141 = vld [vmem:[%s139] ss:$-1 sm:%s140]
    %142 = vrot.lane.b32.xlu0 %v141, 90
    %v143 = vpop.permute.xlu0 %142
    %vm144 = vcmask 15360
    %s145 = scalar_lea.vmem %s1, 75
    %146 = vst.msk [vmem:[%s145] ss:$-56 sm:$0x3] %vm144, %v143
    %s147 = scalar_lea.vmem [#allocation0], 1
    %s148 = smov 3
    %v149 = vld [vmem:[%s147] ss:$-1 sm:%s148]
    %150 = vrot.lane.b32.xlu0 %v149, 88
    %v151 = vpop.permute.xlu0 %150
    %vm152 = vcmask 15360
    %s153 = scalar_lea.vmem %s1, 76
    %154 = vst.msk [vmem:[%s153] ss:$-56 sm:$0x3] %vm152, %v151
    %s155 = scalar_lea.vmem [#allocation0], 1
    %s156 = smov 3
    %v157 = vld [vmem:[%s155] ss:$-1 sm:%s156]
    %158 = vrot.lane.b32.xlu0 %v157, 86
    %v159 = vpop.permute.xlu0 %158
    %vm160 = vcmask 15360
    %s161 = scalar_lea.vmem %s1, 77
    %162 = vst.msk [vmem:[%s161] ss:$-56 sm:$0x3] %vm160, %v159
    %s163 = scalar_lea.vmem [#allocation0], 1
    %s164 = smov 3
    %v165 = vld [vmem:[%s163] ss:$-1 sm:%s164]
    %166 = vrot.lane.b32.xlu0 %v165, 84
    %v167 = vpop.permute.xlu0 %166
    %vm168 = vcmask 15360
    %s169 = scalar_lea.vmem %s1, 78
    %170 = vst.msk [vmem:[%s169] ss:$-56 sm:$0x3] %vm168, %v167
    %s171 = scalar_lea.vmem [#allocation0], 1
    %s172 = smov 3
    %v173 = vld [vmem:[%s171] ss:$-1 sm:%s172]
    %174 = vrot.lane.b32.xlu0 %v173, 82
    %v175 = vpop.permute.xlu0 %174
    %vm176 = vcmask 15360
    %s177 = scalar_lea.vmem %s1, 79
    %178 = vst.msk [vmem:[%s177] ss:$-56 sm:$0x3] %vm176, %v175
    %s179 = scalar_lea.vmem [#allocation0], 1
    %s180 = smov 3
    %v181 = vld [vmem:[%s179] ss:$-1 sm:%s180]
    %182 = vrot.lane.b32.xlu0 %v181, 80
    %v183 = vpop.permute.xlu0 %182
    %vm184 = vcmask 15360
    %s185 = scalar_lea.vmem %s1, 80
    %186 = vst.msk [vmem:[%s185] ss:$-56 sm:$0x3] %vm184, %v183
    %s187 = scalar_lea.vmem [#allocation0], 1
    %s188 = smov 3
    %v189 = vld [vmem:[%s187] ss:$-1 sm:%s188]
    %190 = vrot.lane.b32.xlu0 %v189, 78
    %v191 = vpop.permute.xlu0 %190
    %vm192 = vcmask 15360
    %s193 = scalar_lea.vmem %s1, 81
    %194 = vst.msk [vmem:[%s193] ss:$-56 sm:$0x3] %vm192, %v191
    %s195 = scalar_lea.vmem [#allocation0], 1
    %s196 = smov 3
    %v197 = vld [vmem:[%s195] ss:$-1 sm:%s196]
    %198 = vrot.lane.b32.xlu0 %v197, 76
    %v199 = vpop.permute.xlu0 %198
    %vm200 = vcmask 15360
    %s201 = scalar_lea.vmem %s1, 82
    %202 = vst.msk [vmem:[%s201] ss:$-56 sm:$0x3] %vm200, %v199
    %s203 = scalar_lea.vmem [#allocation0], 1
    %s204 = smov 3
    %v205 = vld [vmem:[%s203] ss:$-1 sm:%s204]
    %206 = vrot.lane.b32.xlu0 %v205, 74
    %v207 = vpop.permute.xlu0 %206
    %vm208 = vcmask 15360
    %s209 = scalar_lea.vmem %s1, 83
    %210 = vst.msk [vmem:[%s209] ss:$-56 sm:$0x3] %vm208, %v207
    %s211 = scalar_lea.vmem [#allocation0], 1
    %s212 = smov 3
    %v213 = vld [vmem:[%s211] ss:$-1 sm:%s212]
    %214 = vrot.lane.b32.xlu0 %v213, 72
    %v215 = vpop.permute.xlu0 %214
    %vm216 = vcmask 15360
    %s217 = scalar_lea.vmem %s1, 84
    %218 = vst.msk [vmem:[%s217] ss:$-56 sm:$0x3] %vm216, %v215
    %s219 = scalar_lea.vmem [#allocation0], 1
    %s220 = smov 3
    %v221 = vld [vmem:[%s219] ss:$-1 sm:%s220]
    %222 = vrot.lane.b32.xlu0 %v221, 70
    %v223 = vpop.permute.xlu0 %222
    %vm224 = vcmask 15360
    %s225 = scalar_lea.vmem %s1, 85
    %226 = vst.msk [vmem:[%s225] ss:$-56 sm:$0x3] %vm224, %v223
    %s227 = scalar_lea.vmem [#allocation0], 1
    %s228 = smov 3
    %v229 = vld [vmem:[%s227] ss:$-1 sm:%s228]
    %230 = vrot.lane.b32.xlu0 %v229, 68
    %v231 = vpop.permute.xlu0 %230
    %vm232 = vcmask 15360
    %s233 = scalar_lea.vmem %s1, 86
    %234 = vst.msk [vmem:[%s233] ss:$-56 sm:$0x3] %vm232, %v231
    %s235 = scalar_lea.vmem [#allocation0], 1
    %s236 = smov 3
    %v237 = vld [vmem:[%s235] ss:$-1 sm:%s236]
    %238 = vrot.lane.b32.xlu0 %v237, 66
    %v239 = vpop.permute.xlu0 %238
    %vm240 = vcmask 15360
    %s241 = scalar_lea.vmem %s1, 87
    %242 = vst.msk [vmem:[%s241] ss:$-56 sm:$0x3] %vm240, %v239
    %v243 = vld [vmem:[#allocation0] sm:$0x3]
    %244 = vrot.lane.b32.xlu0 %v243, 64
    %v245 = vpop.permute.xlu0 %244
    %vm246 = vcmask 15360
    %s247 = scalar_lea.vmem %s1, 32
    %248 = vst.msk [vmem:[%s247] ss:$56 sm:$0x3] %vm246, %v245
    %v249 = vld [vmem:[#allocation0] sm:$0x3]
    %250 = vrot.lane.b32.xlu0 %v249, 62
    %v251 = vpop.permute.xlu0 %250
    %vm252 = vcmask 15360
    %s253 = scalar_lea.vmem %s1, 33
    %254 = vst.msk [vmem:[%s253] ss:$56 sm:$0x3] %vm252, %v251
    %v255 = vld [vmem:[#allocation0] sm:$0x3]
    %256 = vrot.lane.b32.xlu0 %v255, 60
    %v257 = vpop.permute.xlu0 %256
    %vm258 = vcmask 15360
    %s259 = scalar_lea.vmem %s1, 34
    %260 = vst.msk [vmem:[%s259] ss:$56 sm:$0x3] %vm258, %v257
    %v261 = vld [vmem:[#allocation0] sm:$0x3]
    %262 = vrot.lane.b32.xlu0 %v261, 58
    %v263 = vpop.permute.xlu0 %262
    %vm264 = vcmask 15360
    %s265 = scalar_lea.vmem %s1, 35
    %266 = vst.msk [vmem:[%s265] ss:$56 sm:$0x3] %vm264, %v263
    %v267 = vld [vmem:[#allocation0] sm:$0x3]
    %268 = vrot.lane.b32.xlu0 %v267, 56
    %v269 = vpop.permute.xlu0 %268
    %vm270 = vcmask 15360
    %s271 = scalar_lea.vmem %s1, 36
    %272 = vst.msk [vmem:[%s271] ss:$56 sm:$0x3] %vm270, %v269
    %v273 = vld [vmem:[#allocation0] sm:$0x3]
    %274 = vrot.lane.b32.xlu0 %v273, 54
    %v275 = vpop.permute.xlu0 %274
    %vm276 = vcmask 15360
    %s277 = scalar_lea.vmem %s1, 37
    %278 = vst.msk [vmem:[%s277] ss:$56 sm:$0x3] %vm276, %v275
    %v279 = vld [vmem:[#allocation0] sm:$0x3]
    %280 = vrot.lane.b32.xlu0 %v279, 52
    %v281 = vpop.permute.xlu0 %280
    %vm282 = vcmask 15360
    %s283 = scalar_lea.vmem %s1, 38
    %284 = vst.msk [vmem:[%s283] ss:$56 sm:$0x3] %vm282, %v281
    %v285 = vld [vmem:[#allocation0] sm:$0x3]
    %286 = vrot.lane.b32.xlu0 %v285, 50
    %v287 = vpop.permute.xlu0 %286
    %vm288 = vcmask 15360
    %s289 = scalar_lea.vmem %s1, 39
    %290 = vst.msk [vmem:[%s289] ss:$56 sm:$0x3] %vm288, %v287
    %s291 = scalar_lea.vmem [#allocation0], 1
    %s292 = smov 3
    %v293 = vld [vmem:[%s291] ss:$-1 sm:%s292]
    %294 = vrot.lane.b32.xlu0 %v293, 48
    %v295 = vpop.permute.xlu0 %294
    %vm296 = vcmask 15360
    %s297 = scalar_lea.vmem %s1, 96
    %298 = vst.msk [vmem:[%s297] ss:$-56 sm:$0x3] %vm296, %v295
    %s299 = scalar_lea.vmem [#allocation0], 1
    %s300 = smov 3
    %v301 = vld [vmem:[%s299] ss:$-1 sm:%s300]
    %302 = vrot.lane.b32.xlu0 %v301, 46
    %v303 = vpop.permute.xlu0 %302
    %vm304 = vcmask 15360
    %s305 = scalar_lea.vmem %s1, 97
    %306 = vst.msk [vmem:[%s305] ss:$-56 sm:$0x3] %vm304, %v303
    %s307 = scalar_lea.vmem [#allocation0], 1
    %s308 = smov 3
    %v309 = vld [vmem:[%s307] ss:$-1 sm:%s308]
    %310 = vrot.lane.b32.xlu0 %v309, 44
    %v311 = vpop.permute.xlu0 %310
    %vm312 = vcmask 15360
    %s313 = scalar_lea.vmem %s1, 98
    %314 = vst.msk [vmem:[%s313] ss:$-56 sm:$0x3] %vm312, %v311
    %s315 = scalar_lea.vmem [#allocation0], 1
    %s316 = smov 3
    %v317 = vld [vmem:[%s315] ss:$-1 sm:%s316]
    %318 = vrot.lane.b32.xlu0 %v317, 42
    %v319 = vpop.permute.xlu0 %318
    %vm320 = vcmask 15360
    %s321 = scalar_lea.vmem %s1, 99
    %322 = vst.msk [vmem:[%s321] ss:$-56 sm:$0x3] %vm320, %v319
    %s323 = scalar_lea.vmem [#allocation0], 1
    %s324 = smov 3
    %v325 = vld [vmem:[%s323] ss:$-1 sm:%s324]
    %326 = vrot.lane.b32.xlu0 %v325, 40
    %v327 = vpop.permute.xlu0 %326
    %vm328 = vcmask 15360
    %s329 = scalar_lea.vmem %s1, 100
    %330 = vst.msk [vmem:[%s329] ss:$-56 sm:$0x3] %vm328, %v327
    %s331 = scalar_lea.vmem [#allocation0], 1
    %s332 = smov 3
    %v333 = vld [vmem:[%s331] ss:$-1 sm:%s332]
    %334 = vrot.lane.b32.xlu0 %v333, 38
    %v335 = vpop.permute.xlu0 %334
    %vm336 = vcmask 15360
    %s337 = scalar_lea.vmem %s1, 101
    %338 = vst.msk [vmem:[%s337] ss:$-56 sm:$0x3] %vm336, %v335
    %s339 = scalar_lea.vmem [#allocation0], 1
    %s340 = smov 3
    %v341 = vld [vmem:[%s339] ss:$-1 sm:%s340]
    %342 = vrot.lane.b32.xlu0 %v341, 36
    %v343 = vpop.permute.xlu0 %342
    %vm344 = vcmask 15360
    %s345 = scalar_lea.vmem %s1, 102
    %346 = vst.msk [vmem:[%s345] ss:$-56 sm:$0x3] %vm344, %v343
    %s347 = scalar_lea.vmem [#allocation0], 1
    %s348 = smov 3
    %v349 = vld [vmem:[%s347] ss:$-1 sm:%s348]
    %350 = vrot.lane.b32.xlu0 %v349, 34
    %v351 = vpop.permute.xlu0 %350
    %vm352 = vcmask 15360
    %s353 = scalar_lea.vmem %s1, 103
    %354 = vst.msk [vmem:[%s353] ss:$-56 sm:$0x3] %vm352, %v351
    %s355 = scalar_lea.vmem [#allocation0], 1
    %s356 = smov 3
    %v357 = vld [vmem:[%s355] ss:$-1 sm:%s356]
    %358 = vrot.lane.b32.xlu0 %v357, 32
    %v359 = vpop.permute.xlu0 %358
    %vm360 = vcmask 15360
    %s361 = scalar_lea.vmem %s1, 104
    %362 = vst.msk [vmem:[%s361] ss:$-56 sm:$0x3] %vm360, %v359
    %s363 = scalar_lea.vmem [#allocation0], 1
    %s364 = smov 3
    %v365 = vld [vmem:[%s363] ss:$-1 sm:%s364]
    %366 = vrot.lane.b32.xlu0 %v365, 30
    %v367 = vpop.permute.xlu0 %366
    %vm368 = vcmask 15360
    %s369 = scalar_lea.vmem %s1, 105
    %370 = vst.msk [vmem:[%s369] ss:$-56 sm:$0x3] %vm368, %v367

// kernel: forward_pallas.1
$region0: #{forward_pallas.1}
  #allocation0 [shape = 'u32[]', space=smem, size = 0x4, offset = 0x4, fixed_abs, tag = 'smem constant byte address 0x4 - core index']
  #allocation1 [shape = 'u32[72,128]{1,0:T(1,128)}', space=vmem, size = 0x9000, scoped, tag = 'internal scratch']
  #allocation2 [shape = 'f32[4,128]{1,0:T(4,128)}', space=vmem, size = 0x800, scoped, tag = 'scratch operand']
  #allocation3 [shape = 'f32[4,128]{1,0:T(4,128)}', space=vmem, size = 0x800, scoped, tag = 'scratch operand']
  #allocation4 [shape = 'f32[4,128]{1,0:T(4,128)}', space=vmem, size = 0x800, scoped, tag = 'scratch operand']
  #allocation5 [shape = 'f32[4,128]{1,0:T(4,128)}', space=vmem, size = 0x800, scoped, tag = 'scratch operand']
  #allocation6 [shape = 'f32[8,128]{1,0:T(8,128)}', space=vmem, size = 0x1000, scoped, tag = 'scratch operand']
  #allocation7 [shape = 'f32[8,128]{1,0:T(8,128)}', space=vmem, size = 0x1000, scoped, tag = 'scratch operand']
  #allocation8 [shape = 'f32[2,64]{1,0:T(2,128)}', space=vmem, size = 0x400, scoped, tag = 'scratch operand']
  %s0 = inlined_call_operand.vmem [shape: f32[2,128], index: 0, kind: input, shape index: {}]
  %s1 = inlined_call_operand.vmem [shape: f32[61,32], index: 1, kind: input, shape index: {}]
  %s2 = inlined_call_operand.vmem [shape: f32[65,15], index: 2, kind: input, shape index: {}]
  %s3 = inlined_call_operand.hbm [shape: f32[2,15], index: 3, kind: output, shape index: {}]
  %s4 = sld [smem:[#allocation0]]
  $region22: #{forward_pallas.1} parent=0
    _
  %s6 = ssub.s32 1, %s4
  %s7 = scalar_select 0, %s6, %s4
  $region1: #{forward_pallas.1} parent=0
    #allocation9 [shape = 'u8[1024]{0}', space=vmem, size = 0x400, scoped, tag = 'output window, operand 0, single buffered']
    #allocation10 [shape = 's32[1]{0}', space=sflag, size = 0x4, scoped, tag = 'scoped memory for forward_pallas.1']
    %8 = vsyncpa [#allocation10], 0
    // Predicated region
    $region2: #{forward_pallas.1} parent=1 // pred_check
      _
    $region3: #{forward_pallas.1} parent=1 // pred_check_branch
      %10 = sbr.rel (0) target = $region5
    $region4: #{forward_pallas.1} parent=1 // pred_region
      _
    $region5: #{forward_pallas.1} parent=1 // pred_fallthru
      _
    // Predicated region
    $region6: #{forward_pallas.1} parent=1 // pred_check
      _
    $region7: #{forward_pallas.1} parent=1 // pred_check_branch
      %12 = sbr.rel (0) target = $region9
    $region8: #{forward_pallas.1} parent=1 // pred_region
      _
    $region9: #{forward_pallas.1} parent=1 // pred_fallthru
      _
    // Predicated region
    $region10: #{forward_pallas.1} parent=1 // pred_check
      _
    $region11: #{forward_pallas.1} parent=1 // pred_check_branch
      %14 = sbr.rel (0) target = $region13
    $region12: #{forward_pallas.1} parent=1 // pred_region
      _
    $region13: #{forward_pallas.1} parent=1 // pred_fallthru
      _
    %v15 = vlaneseq
    %v16 = vand.u32 %v15, 127
    %v17 = vadd.s32 %v16, 1
    %v18 = vand.u32 %v17, 63
    %vm19 = vcmp.ge.s32.totalorder %v18, 1
    %vm20 = vcmp.le.s32.totalorder %v18, 50
    %vm21 = vmand %vm19, %vm20
    %vm22 = vcmask 3072
    %23 = vst.msk [vmem:[#allocation2] sm:$0xf] %vm22, 0.0
    %24 = vst.msk [vmem:[#allocation3] sm:$0xf] %vm22, 0.0
    %25 = vst.msk [vmem:[#allocation4] sm:$0xf] %vm22, 0.0
    %26 = vst.msk [vmem:[#allocation5] sm:$0xf] %vm22, 0.0
    %vm27 = vcmask 7168
    %28 = vst.msk [vmem:[#allocation7] sm:$0xff] %vm27, 0.0
    %29 = vst [vmem:[#allocation6] sm:$0xff] 0.0
    %v30 = vld [vmem:[%s1] sm:$0xf]
    %v31 = vld [vmem:[%s0 + $0x1] sm:$0x1]
    %v32 = vld [vmem:[%s0] sm:$0x1]
    %v34 = vrot.slane %v32, 7
    %35 = vrot.lane.b32.xlu0 %v34, 127
    %v36 = vpop.permute.xlu0 %35
    %v39 = vrot.slane %v31, 6
    %40 = vrot.lane.b32.xlu0 %v39, 127
    %v41 = vpop.permute.xlu0 %40
    %vm43 = vcmask 1040384
    %v44 = vsel %vm43, %v31, %v36
    %vm45 = vcmask 1041408
    %v46 = vsel %vm45, %v44, %v41
    %48 = vset.pattern.permute.xlu0 3
    %49 = vperm.xlu0 %48, %v30
    %v50 = vpop.permute.xlu0 %49
    %vm52 = vcmask 23552
    %v53 = vsel %vm52, %v30, 0
    %vm55 = vcmask 1042432
    %v57 = vsel %vm55, %v46, 0
    %59 = vmatpush.msra.mxu0 0.0
    %60 = vmatpush.msra.mxu0 0.0
    %61 = vmatpush.msra.mxu0 0.0
    %62 = vmatpush.msra.mxu0 0.0
    %63 = vmatpush.msra.mxu0 0.0
    %64 = vmatpush.msra.mxu0 0.0
    %65 = vmatpush.msra.mxu0 0.0
    %66 = vmatpush.msra.mxu0 0.0
    %67 = vmatpush.msra.mxu0 0.0
    %68 = vmatpush.msra.mxu0 0.0
    %69 = vmatpush.msra.mxu0 0.0
    %70 = vmatpush.msra.mxu0 0.0
    %71 = vmatpush.msra.mxu0 0.0
    %72 = vmatpush.msra.mxu0 0.0
    %73 = vmatpush.msra.mxu0 0.0
    %74 = vmatpush.msra.mxu0 %v57
    %75 = vmatmul.f32.gmra.mxu0 %v53
    %v76 = vpop.f32.mrf.mxu0
    %v77 = vadd.f32 %v50, %v76
    %78 = vdwg.mxu0
    %v79 = vrot.slane %v31, 7
    %v81 = vrot.slane %v32, 6
    %82 = vrot.lane.b32.xlu0 %v81, 127
    %v83 = vpop.permute.xlu0 %82
    %v85 = vsel %vm43, %v32, %v79
    %v86 = vsel %vm45, %v85, %v83
    %88 = vrot.lane.b32.xlu0 %v86, 127
    %v89 = vpop.permute.xlu0 %88
    %v90 = vsel %vm55, %v89, 0
    %92 = vmatpush.msra.mxu0 0.0
    %93 = vmatpush.msra.mxu0 0.0
    %94 = vmatpush.msra.mxu0 0.0
    %95 = vmatpush.msra.mxu0 0.0
    %96 = vmatpush.msra.mxu0 0.0
    %97 = vmatpush.msra.mxu0 0.0
    %98 = vmatpush.msra.mxu0 0.0
    %99 = vmatpush.msra.mxu0 0.0
    %100 = vmatpush.msra.mxu0 0.0
    %101 = vmatpush.msra.mxu0 0.0
    %102 = vmatpush.msra.mxu0 0.0
    %103 = vmatpush.msra.mxu0 0.0
    %104 = vmatpush.msra.mxu0 0.0
    %105 = vmatpush.msra.mxu0 0.0
    %106 = vmatpush.msra.mxu0 0.0
    %107 = vmatpush.msra.mxu0 %v90
    %108 = vmatmul.f32.gmra.mxu0 %v53
    %v109 = vpop.f32.mrf.mxu0
    %v110 = vadd.f32 %v50, %v109
    %111 = vdwg.mxu0
    %vm112 = vcmp.ge.f32.partialorder %v77, 0.0
    %v113 = vmul.f32 %v77, 0.01
    %v114 = vsel %vm112, %v77, %v113
    %v115 = vsel %vm21, 1, 0
    %vm116 = vcmp.eq.s32.totalorder %v115, 1
    %v117 = vsel %vm116, %v114, 0.0
    %119 = vrot.lane.b32.xlu0 %v117, 1
    %v120 = vpop.permute.xlu0 %119
    %vm122 = vcmask 1035272
    %123 = vst.msk [vmem:[#allocation2] sm:$0xf] %vm122, %v120
    %vm124 = vcmp.ge.f32.partialorder %v110, 0.0
    %v125 = vmul.f32 %v110, 0.01
    %v126 = vsel %vm124, %v110, %v125
    %v127 = vsel %vm116, %v126, 0.0
    %129 = vrot.lane.b32.xlu0 %v127, 1
    %v130 = vpop.permute.xlu0 %129
    %132 = vst.msk [vmem:[#allocation3] sm:$0xf] %vm122, %v130
    %v133 = vld [vmem:[%s1 + $0x4] sm:$0xf]
    %v134 = vld [vmem:[#allocation3] sm:$0xf]
    %v135 = vld [vmem:[#allocation2] sm:$0xf]
    %137 = vrot.lane.b32.xlu0 %v133, 124
    %v138 = vpop.permute.xlu0 %137
    %140 = vrot.lane.b32.xlu0 %v135, 127
    %v141 = vpop.permute.xlu0 %140
    %vm142 = vcmask 31744
    %v143 = vsel %vm142, %v138, 0
    %vm145 = vcmask 1043456
    %v146 = vsel %vm145, %v141, 0
    %148 = vmatpush.msra.mxu0 0.0
    %149 = vmatpush.msra.mxu0 0.0
    %150 = vmatpush.msra.mxu0 0.0
    %151 = vmatpush.msra.mxu0 0.0
    %152 = vmatpush.msra.mxu0 0.0
    %153 = vmatpush.msra.mxu0 0.0
    %154 = vmatpush.msra.mxu0 0.0
    %155 = vmatpush.msra.mxu0 0.0
    %156 = vmatpush.msra.mxu0 0.0
    %157 = vmatpush.msra.mxu0 0.0
    %158 = vmatpush.msra.mxu0 0.0
    %159 = vmatpush.msra.mxu0 0.0
    %160 = vmatpush.msra.mxu0 0.0
    %161 = vmatpush.msra.mxu0 0.0
    %162 = vmatpush.msra.mxu0 0.0
    %163 = vmatpush.msra.mxu0 %v146
    %164 = vmatmul.f32.gmra.mxu0 %v143
    %v165 = vpop.f32.mrf.mxu0
    %v166 = vadd.f32 0.0, %v165
    %167 = vdwg.mxu0
    %v168 = vsel %vm142, %v133, 0
    %v171 = vsel %vm145, %v134, 0
    %173 = vmatpush.msra.mxu0 0.0
    %174 = vmatpush.msra.mxu0 0.0
    %175 = vmatpush.msra.mxu0 0.0
    %176 = vmatpush.msra.mxu0 0.0
    %177 = vmatpush.msra.mxu0 0.0
    %178 = vmatpush.msra.mxu0 0.0
    %179 = vmatpush.msra.mxu0 0.0
    %180 = vmatpush.msra.mxu0 0.0
    %181 = vmatpush.msra.mxu0 0.0
    %182 = vmatpush.msra.mxu0 0.0
    %183 = vmatpush.msra.mxu0 0.0
    %184 = vmatpush.msra.mxu0 0.0
    %185 = vmatpush.msra.mxu0 0.0
    %186 = vmatpush.msra.mxu0 0.0
    %187 = vmatpush.msra.mxu0 0.0
    %188 = vmatpush.msra.mxu0 %v171
    %189 = vmatmul.f32.gmra.mxu0 %v168
    %v190 = vpop.f32.mrf.mxu0
    %v191 = vadd.f32 %v166, %v190
    %192 = vdwg.mxu0
    %193 = vrot.lane.b32.xlu0 %v133, 120
    %v194 = vpop.permute.xlu0 %193
    %195 = vrot.lane.b32.xlu0 %v134, 127
    %v196 = vpop.permute.xlu0 %195
    %v197 = vsel %vm142, %v194, 0
    %v199 = vsel %vm145, %v196, 0
    %201 = vmatpush.msra.mxu0 0.0
    %202 = vmatpush.msra.mxu0 0.0
    %203 = vmatpush.msra.mxu0 0.0
    %204 = vmatpush.msra.mxu0 0.0
    %205 = vmatpush.msra.mxu0 0.0
    %206 = vmatpush.msra.mxu0 0.0
    %207 = vmatpush.msra.mxu0 0.0
    %208 = vmatpush.msra.mxu0 0.0
    %209 = vmatpush.msra.mxu0 0.0
    %210 = vmatpush.msra.mxu0 0.0
    %211 = vmatpush.msra.mxu0 0.0
    %212 = vmatpush.msra.mxu0 0.0
    %213 = vmatpush.msra.mxu0 0.0
    %214 = vmatpush.msra.mxu0 0.0
    %215 = vmatpush.msra.mxu0 0.0
    %216 = vmatpush.msra.mxu0 %v199
    %217 = vmatmul.f32.gmra.mxu0 %v197
    %v218 = vpop.f32.mrf.mxu0
    %v219 = vadd.f32 0.0, %v218
    %220 = vdwg.mxu0
    %v221 = vadd.f32 %v191, %v219
    %222 = vset.pattern.permute.xlu0 12
    %223 = vperm.xlu0 %222, %v133
    %v224 = vpop.permute.xlu0 %223
    %v226 = vadd.f32 %v221, %v224
    %227 = vmatpush.msra.mxu0 0.0
    %228 = vmatpush.msra.mxu0 0.0
    %229 = vmatpush.msra.mxu0 0.0
    %230 = vmatpush.msra.mxu0 0.0
    %231 = vmatpush.msra.mxu0 0.0
    %232 = vmatpush.msra.mxu0 0.0
    %233 = vmatpush.msra.mxu0 0.0
    %234 = vmatpush.msra.mxu0 0.0
    %235 = vmatpush.msra.mxu0 0.0
    %236 = vmatpush.msra.mxu0 0.0
    %237 = vmatpush.msra.mxu0 0.0
    %238 = vmatpush.msra.mxu0 0.0
    %239 = vmatpush.msra.mxu0 0.0
    %240 = vmatpush.msra.mxu0 0.0
    %241 = vmatpush.msra.mxu0 0.0
    %242 = vmatpush.msra.mxu0 %v199
    %243 = vmatmul.f32.gmra.mxu0 %v143
    %v244 = vpop.f32.mrf.mxu0
    %v245 = vadd.f32 0.0, %v244
    %246 = vdwg.mxu0
    %247 = vmatpush.msra.mxu0 0.0
    %248 = vmatpush.msra.mxu0 0.0
    %249 = vmatpush.msra.mxu0 0.0
    %250 = vmatpush.msra.mxu0 0.0
    %251 = vmatpush.msra.mxu0 0.0
    %252 = vmatpush.msra.mxu0 0.0
    %253 = vmatpush.msra.mxu0 0.0
    %254 = vmatpush.msra.mxu0 0.0
    %255 = vmatpush.msra.mxu0 0.0
    %256 = vmatpush.msra.mxu0 0.0
    %257 = vmatpush.msra.mxu0 0.0
    %258 = vmatpush.msra.mxu0 0.0
    %259 = vmatpush.msra.mxu0 0.0
    %260 = vmatpush.msra.mxu0 0.0
    %261 = vmatpush.msra.mxu0 0.0
    %262 = vmatpush.msra.mxu0 %v146
    %263 = vmatmul.f32.gmra.mxu0 %v168
    %v264 = vpop.f32.mrf.mxu0
    %v265 = vadd.f32 %v245, %v264
    %266 = vdwg.mxu0
    %267 = vrot.lane.b32.xlu0 %v135, 126
    %v268 = vpop.permute.xlu0 %267
    %v269 = vsel %vm145, %v268, 0
    %271 = vmatpush.msra.mxu0 0.0
    %272 = vmatpush.msra.mxu0 0.0
    %273 = vmatpush.msra.mxu0 0.0
    %274 = vmatpush.msra.mxu0 0.0
    %275 = vmatpush.msra.mxu0 0.0
    %276 = vmatpush.msra.mxu0 0.0
    %277 = vmatpush.msra.mxu0 0.0
    %278 = vmatpush.msra.mxu0 0.0
    %279 = vmatpush.msra.mxu0 0.0
    %280 = vmatpush.msra.mxu0 0.0
    %281 = vmatpush.msra.mxu0 0.0
    %282 = vmatpush.msra.mxu0 0.0
    %283 = vmatpush.msra.mxu0 0.0
    %284 = vmatpush.msra.mxu0 0.0
    %285 = vmatpush.msra.mxu0 0.0
    %286 = vmatpush.msra.mxu0 %v269
    %287 = vmatmul.f32.gmra.mxu0 %v197
    %v288 = vpop.f32.mrf.mxu0
    %v289 = vadd.f32 0.0, %v288
    %290 = vdwg.mxu0
    %v291 = vadd.f32 %v265, %v289
    %v292 = vadd.f32 %v291, %v224
    %v293 = vmax.f32 %v226, 0.0
    %v294 = vsel %vm116, %v293, 0.0
    %296 = vrot.lane.b32.xlu0 %v294, 1
    %v297 = vpop.permute.xlu0 %296
    %299 = vst.msk [vmem:[#allocation4] sm:$0xf] %vm122, %v297
    %v300 = vmax.f32 %v292, 0.0
    %v301 = vsel %vm116, %v300, 0.0
    %303 = vrot.lane.b32.xlu0 %v301, 1
    %v304 = vpop.permute.xlu0 %303
    %306 = vst.msk [vmem:[#allocation5] sm:$0xf] %vm122, %v304
    %v307 = vld [vmem:[%s1 + $0x8] sm:$0xf]
    %v308 = vld [vmem:[#allocation5] sm:$0xf]
    %v309 = vld [vmem:[#allocation4] sm:$0xf]
    %311 = vrot.lane.b32.xlu0 %v307, 124
    %v312 = vpop.permute.xlu0 %311
    %314 = vrot.lane.b32.xlu0 %v309, 127
    %v315 = vpop.permute.xlu0 %314
    %v316 = vsel %vm142, %v312, 0
    %v318 = vsel %vm145, %v315, 0
    %320 = vmatpush.msra.mxu0 0.0
    %321 = vmatpush.msra.mxu0 0.0
    %322 = vmatpush.msra.mxu0 0.0
    %323 = vmatpush.msra.mxu0 0.0
    %324 = vmatpush.msra.mxu0 0.0
    %325 = vmatpush.msra.mxu0 0.0
    %326 = vmatpush.msra.mxu0 0.0
    %327 = vmatpush.msra.mxu0 0.0
    %328 = vmatpush.msra.mxu0 0.0
    %329 = vmatpush.msra.mxu0 0.0
    %330 = vmatpush.msra.mxu0 0.0
    %331 = vmatpush.msra.mxu0 0.0
    %332 = vmatpush.msra.mxu0 0.0
    %333 = vmatpush.msra.mxu0 0.0
    %334 = vmatpush.msra.mxu0 0.0
    %335 = vmatpush.msra.mxu0 %v318
    %336 = vmatmul.f32.gmra.mxu0 %v316
    %v337 = vpop.f32.mrf.mxu0
    %v338 = vadd.f32 0.0, %v337
    %339 = vdwg.mxu0
    %v340 = vsel %vm142, %v307, 0
    %v343 = vsel %vm145, %v308, 0
    %345 = vmatpush.msra.mxu0 0.0
    %346 = vmatpush.msra.mxu0 0.0
    %347 = vmatpush.msra.mxu0 0.0
    %348 = vmatpush.msra.mxu0 0.0
    %349 = vmatpush.msra.mxu0 0.0
    %350 = vmatpush.msra.mxu0 0.0
    %351 = vmatpush.msra.mxu0 0.0
    %352 = vmatpush.msra.mxu0 0.0
    %353 = vmatpush.msra.mxu0 0.0
    %354 = vmatpush.msra.mxu0 0.0
    %355 = vmatpush.msra.mxu0 0.0
    %356 = vmatpush.msra.mxu0 0.0
    %357 = vmatpush.msra.mxu0 0.0
    %358 = vmatpush.msra.mxu0 0.0
    %359 = vmatpush.msra.mxu0 0.0
    %360 = vmatpush.msra.mxu0 %v343
    %361 = vmatmul.f32.gmra.mxu0 %v340
    %v362 = vpop.f32.mrf.mxu0
    %v363 = vadd.f32 %v338, %v362
    %364 = vdwg.mxu0
    %365 = vrot.lane.b32.xlu0 %v307, 120
    %v366 = vpop.permute.xlu0 %365
    %367 = vrot.lane.b32.xlu0 %v308, 127
    %v368 = vpop.permute.xlu0 %367
    %v369 = vsel %vm142, %v366, 0
    %v371 = vsel %vm145, %v368, 0
    %373 = vmatpush.msra.mxu0 0.0
    %374 = vmatpush.msra.mxu0 0.0
    %375 = vmatpush.msra.mxu0 0.0
    %376 = vmatpush.msra.mxu0 0.0
    %377 = vmatpush.msra.mxu0 0.0
    %378 = vmatpush.msra.mxu0 0.0
    %379 = vmatpush.msra.mxu0 0.0
    %380 = vmatpush.msra.mxu0 0.0
    %381 = vmatpush.msra.mxu0 0.0
    %382 = vmatpush.msra.mxu0 0.0
    %383 = vmatpush.msra.mxu0 0.0
    %384 = vmatpush.msra.mxu0 0.0
    %385 = vmatpush.msra.mxu0 0.0
    %386 = vmatpush.msra.mxu0 0.0
    %387 = vmatpush.msra.mxu0 0.0
    %388 = vmatpush.msra.mxu0 %v371
    %389 = vmatmul.f32.gmra.mxu0 %v369
    %v390 = vpop.f32.mrf.mxu0
    %v391 = vadd.f32 0.0, %v390
    %392 = vdwg.mxu0
    %v393 = vadd.f32 %v363, %v391
    %394 = vset.pattern.permute.xlu0 12
    %395 = vperm.xlu0 %394, %v307
    %v396 = vpop.permute.xlu0 %395
    %v398 = vadd.f32 %v393, %v396
    %399 = vmatpush.msra.mxu0 0.0
    %400 = vmatpush.msra.mxu0 0.0
    %401 = vmatpush.msra.mxu0 0.0
    %402 = vmatpush.msra.mxu0 0.0
    %403 = vmatpush.msra.mxu0 0.0
    %404 = vmatpush.msra.mxu0 0.0
    %405 = vmatpush.msra.mxu0 0.0
    %406 = vmatpush.msra.mxu0 0.0
    %407 = vmatpush.msra.mxu0 0.0
    %408 = vmatpush.msra.mxu0 0.0
    %409 = vmatpush.msra.mxu0 0.0
    %410 = vmatpush.msra.mxu0 0.0
    %411 = vmatpush.msra.mxu0 0.0
    %412 = vmatpush.msra.mxu0 0.0
    %413 = vmatpush.msra.mxu0 0.0
    %414 = vmatpush.msra.mxu0 %v371
    %415 = vmatmul.f32.gmra.mxu0 %v316
    %v416 = vpop.f32.mrf.mxu0
    %v417 = vadd.f32 0.0, %v416
    %418 = vdwg.mxu0
    %419 = vmatpush.msra.mxu0 0.0
    %420 = vmatpush.msra.mxu0 0.0
    %421 = vmatpush.msra.mxu0 0.0
    %422 = vmatpush.msra.mxu0 0.0
    %423 = vmatpush.msra.mxu0 0.0
    %424 = vmatpush.msra.mxu0 0.0
    %425 = vmatpush.msra.mxu0 0.0
    %426 = vmatpush.msra.mxu0 0.0
    %427 = vmatpush.msra.mxu0 0.0
    %428 = vmatpush.msra.mxu0 0.0
    %429 = vmatpush.msra.mxu0 0.0
    %430 = vmatpush.msra.mxu0 0.0
    %431 = vmatpush.msra.mxu0 0.0
    %432 = vmatpush.msra.mxu0 0.0
    %433 = vmatpush.msra.mxu0 0.0
    %434 = vmatpush.msra.mxu0 %v318
    %435 = vmatmul.f32.gmra.mxu0 %v340
    %v436 = vpop.f32.mrf.mxu0
    %v437 = vadd.f32 %v417, %v436
    %438 = vdwg.mxu0
    %439 = vrot.lane.b32.xlu0 %v309, 126
    %v440 = vpop.permute.xlu0 %439
    %v441 = vsel %vm145, %v440, 0
    %443 = vmatpush.msra.mxu0 0.0
    %444 = vmatpush.msra.mxu0 0.0
    %445 = vmatpush.msra.mxu0 0.0
    %446 = vmatpush.msra.mxu0 0.0
    %447 = vmatpush.msra.mxu0 0.0
    %448 = vmatpush.msra.mxu0 0.0
    %449 = vmatpush.msra.mxu0 0.0
    %450 = vmatpush.msra.mxu0 0.0
    %451 = vmatpush.msra.mxu0 0.0
    %452 = vmatpush.msra.mxu0 0.0
    %453 = vmatpush.msra.mxu0 0.0
    %454 = vmatpush.msra.mxu0 0.0
    %455 = vmatpush.msra.mxu0 0.0
    %456 = vmatpush.msra.mxu0 0.0
    %457 = vmatpush.msra.mxu0 0.0
    %458 = vmatpush.msra.mxu0 %v441
    %459 = vmatmul.f32.gmra.mxu0 %v369
    %v460 = vpop.f32.mrf.mxu0
    %v461 = vadd.f32 0.0, %v460
    %462 = vdwg.mxu0
    %v463 = vadd.f32 %v437, %v461
    %v464 = vadd.f32 %v463, %v396
    %v465 = vld [vmem:[#allocation2] sm:$0xf]
    %467 = vrot.lane.b32.xlu0 %v465, 127
    %v468 = vpop.permute.xlu0 %467
    %v470 = vadd.f32 %v398, %v468
    %v471 = vmax.f32 %v470, 0.0
    %v472 = vsel %vm116, %v471, 0.0
    %v473 = vld [vmem:[#allocation3] sm:$0xf]
    %475 = vrot.lane.b32.xlu0 %v473, 127
    %v476 = vpop.permute.xlu0 %475
    %v478 = vadd.f32 %v464, %v476
    %v479 = vmax.f32 %v478, 0.0
    %v480 = vsel %vm116, %v479, 0.0
    %482 = vrot.lane.b32.xlu0 %v472, 1
    %v483 = vpop.permute.xlu0 %482
    %485 = vst.msk [vmem:[#allocation2] sm:$0xf] %vm122, %v483
    %487 = vrot.lane.b32.xlu0 %v480, 1
    %v488 = vpop.permute.xlu0 %487
    %490 = vst.msk [vmem:[#allocation3] sm:$0xf] %vm122, %v488
    %v491 = vld [vmem:[%s1 + $0xc] sm:$0xf]
    %v492 = vld [vmem:[#allocation3] sm:$0xf]
    %v493 = vld [vmem:[#allocation2] sm:$0xf]
    %495 = vrot.lane.b32.xlu0 %v491, 124
    %v496 = vpop.permute.xlu0 %495
    %498 = vrot.lane.b32.xlu0 %v493, 127
    %v499 = vpop.permute.xlu0 %498
    %v500 = vsel %vm142, %v496, 0
    %v502 = vsel %vm145, %v499, 0
    %504 = vmatpush.msra.mxu0 0.0
    %505 = vmatpush.msra.mxu0 0.0
    %506 = vmatpush.msra.mxu0 0.0
    %507 = vmatpush.msra.mxu0 0.0
    %508 = vmatpush.msra.mxu0 0.0
    %509 = vmatpush.msra.mxu0 0.0
    %510 = vmatpush.msra.mxu0 0.0
    %511 = vmatpush.msra.mxu0 0.0
    %512 = vmatpush.msra.mxu0 0.0
    %513 = vmatpush.msra.mxu0 0.0
    %514 = vmatpush.msra.mxu0 0.0
    %515 = vmatpush.msra.mxu0 0.0
    %516 = vmatpush.msra.mxu0 0.0
    %517 = vmatpush.msra.mxu0 0.0
    %518 = vmatpush.msra.mxu0 0.0
    %519 = vmatpush.msra.mxu0 %v502
    %520 = vmatmul.f32.gmra.mxu0 %v500
    %v521 = vpop.f32.mrf.mxu0
    %v522 = vadd.f32 0.0, %v521
    %523 = vdwg.mxu0
    %v524 = vsel %vm142, %v491, 0
    %v527 = vsel %vm145, %v492, 0
    %529 = vmatpush.msra.mxu0 0.0
    %530 = vmatpush.msra.mxu0 0.0
    %531 = vmatpush.msra.mxu0 0.0
    %532 = vmatpush.msra.mxu0 0.0
    %533 = vmatpush.msra.mxu0 0.0
    %534 = vmatpush.msra.mxu0 0.0
    %535 = vmatpush.msra.mxu0 0.0
    %536 = vmatpush.msra.mxu0 0.0
    %537 = vmatpush.msra.mxu0 0.0
    %538 = vmatpush.msra.mxu0 0.0
    %539 = vmatpush.msra.mxu0 0.0
    %540 = vmatpush.msra.mxu0 0.0
    %541 = vmatpush.msra.mxu0 0.0
    %542 = vmatpush.msra.mxu0 0.0
    %543 = vmatpush.msra.mxu0 0.0
    %544 = vmatpush.msra.mxu0 %v527
    %545 = vmatmul.f32.gmra.mxu0 %v524
    %v546 = vpop.f32.mrf.mxu0
    %v547 = vadd.f32 %v522, %v546
    %548 = vdwg.mxu0
    %549 = vrot.lane.b32.xlu0 %v491, 120
    %v550 = vpop.permute.xlu0 %549
    %551 = vrot.lane.b32.xlu0 %v492, 127
    %v552 = vpop.permute.xlu0 %551
    %v553 = vsel %vm142, %v550, 0
    %v555 = vsel %vm145, %v552, 0
    %557 = vmatpush.msra.mxu0 0.0
    %558 = vmatpush.msra.mxu0 0.0
    %559 = vmatpush.msra.mxu0 0.0
    %560 = vmatpush.msra.mxu0 0.0
    %561 = vmatpush.msra.mxu0 0.0
    %562 = vmatpush.msra.mxu0 0.0
    %563 = vmatpush.msra.mxu0 0.0
    %564 = vmatpush.msra.mxu0 0.0
    %565 = vmatpush.msra.mxu0 0.0
    %566 = vmatpush.msra.mxu0 0.0
    %567 = vmatpush.msra.mxu0 0.0
    %568 = vmatpush.msra.mxu0 0.0
    %569 = vmatpush.msra.mxu0 0.0
    %570 = vmatpush.msra.mxu0 0.0
    %571 = vmatpush.msra.mxu0 0.0
    %572 = vmatpush.msra.mxu0 %v555
    %573 = vmatmul.f32.gmra.mxu0 %v553
    %v574 = vpop.f32.mrf.mxu0
    %v575 = vadd.f32 0.0, %v574
    %576 = vdwg.mxu0
    %v577 = vadd.f32 %v547, %v575
    %578 = vset.pattern.permute.xlu0 12
    %579 = vperm.xlu0 %578, %v491
    %v580 = vpop.permute.xlu0 %579
    %v582 = vadd.f32 %v577, %v580
    %583 = vmatpush.msra.mxu0 0.0
    %584 = vmatpush.msra.mxu0 0.0
    %585 = vmatpush.msra.mxu0 0.0
    %586 = vmatpush.msra.mxu0 0.0
    %587 = vmatpush.msra.mxu0 0.0
    %588 = vmatpush.msra.mxu0 0.0
    %589 = vmatpush.msra.mxu0 0.0
    %590 = vmatpush.msra.mxu0 0.0
    %591 = vmatpush.msra.mxu0 0.0
    %592 = vmatpush.msra.mxu0 0.0
    %593 = vmatpush.msra.mxu0 0.0
    %594 = vmatpush.msra.mxu0 0.0
    %595 = vmatpush.msra.mxu0 0.0
    %596 = vmatpush.msra.mxu0 0.0
    %597 = vmatpush.msra.mxu0 0.0
    %598 = vmatpush.msra.mxu0 %v555
    %599 = vmatmul.f32.gmra.mxu0 %v500
    %v600 = vpop.f32.mrf.mxu0
    %v601 = vadd.f32 0.0, %v600
    %602 = vdwg.mxu0
    %603 = vmatpush.msra.mxu0 0.0
    %604 = vmatpush.msra.mxu0 0.0
    %605 = vmatpush.msra.mxu0 0.0
    %606 = vmatpush.msra.mxu0 0.0
    %607 = vmatpush.msra.mxu0 0.0
    %608 = vmatpush.msra.mxu0 0.0
    %609 = vmatpush.msra.mxu0 0.0
    %610 = vmatpush.msra.mxu0 0.0
    %611 = vmatpush.msra.mxu0 0.0
    %612 = vmatpush.msra.mxu0 0.0
    %613 = vmatpush.msra.mxu0 0.0
    %614 = vmatpush.msra.mxu0 0.0
    %615 = vmatpush.msra.mxu0 0.0
    %616 = vmatpush.msra.mxu0 0.0
    %617 = vmatpush.msra.mxu0 0.0
    %618 = vmatpush.msra.mxu0 %v502
    %619 = vmatmul.f32.gmra.mxu0 %v524
    %v620 = vpop.f32.mrf.mxu0
    %v621 = vadd.f32 %v601, %v620
    %622 = vdwg.mxu0
    %623 = vrot.lane.b32.xlu0 %v493, 126
    %v624 = vpop.permute.xlu0 %623
    %v625 = vsel %vm145, %v624, 0
    %627 = vmatpush.msra.mxu0 0.0
    %628 = vmatpush.msra.mxu0 0.0
    %629 = vmatpush.msra.mxu0 0.0
    %630 = vmatpush.msra.mxu0 0.0
    %631 = vmatpush.msra.mxu0 0.0
    %632 = vmatpush.msra.mxu0 0.0
    %633 = vmatpush.msra.mxu0 0.0
    %634 = vmatpush.msra.mxu0 0.0
    %635 = vmatpush.msra.mxu0 0.0
    %636 = vmatpush.msra.mxu0 0.0
    %637 = vmatpush.msra.mxu0 0.0
    %638 = vmatpush.msra.mxu0 0.0
    %639 = vmatpush.msra.mxu0 0.0
    %640 = vmatpush.msra.mxu0 0.0
    %641 = vmatpush.msra.mxu0 0.0
    %642 = vmatpush.msra.mxu0 %v625
    %643 = vmatmul.f32.gmra.mxu0 %v553
    %v644 = vpop.f32.mrf.mxu0
    %v645 = vadd.f32 0.0, %v644
    %646 = vdwg.mxu0
    %v647 = vadd.f32 %v621, %v645
    %v648 = vadd.f32 %v647, %v580
    %v649 = vmax.f32 %v582, 0.0
    %v650 = vsel %vm116, %v649, 0.0
    %652 = vrot.lane.b32.xlu0 %v650, 1
    %v653 = vpop.permute.xlu0 %652
    %655 = vst.msk [vmem:[#allocation4] sm:$0xf] %vm122, %v653
    %v656 = vmax.f32 %v648, 0.0
    %v657 = vsel %vm116, %v656, 0.0
    %659 = vrot.lane.b32.xlu0 %v657, 1
    %v660 = vpop.permute.xlu0 %659
    %662 = vst.msk [vmem:[#allocation5] sm:$0xf] %vm122, %v660
    %v663 = vld [vmem:[%s1 + $0x10] sm:$0xf]
    %v664 = vld [vmem:[#allocation5] sm:$0xf]
    %v665 = vld [vmem:[#allocation4] sm:$0xf]
    %667 = vrot.lane.b32.xlu0 %v663, 124
    %v668 = vpop.permute.xlu0 %667
    %670 = vrot.lane.b32.xlu0 %v665, 127
    %v671 = vpop.permute.xlu0 %670
    %v672 = vsel %vm142, %v668, 0
    %v674 = vsel %vm145, %v671, 0
    %676 = vmatpush.msra.mxu0 0.0
    %677 = vmatpush.msra.mxu0 0.0
    %678 = vmatpush.msra.mxu0 0.0
    %679 = vmatpush.msra.mxu0 0.0
    %680 = vmatpush.msra.mxu0 0.0
    %681 = vmatpush.msra.mxu0 0.0
    %682 = vmatpush.msra.mxu0 0.0
    %683 = vmatpush.msra.mxu0 0.0
    %684 = vmatpush.msra.mxu0 0.0
    %685 = vmatpush.msra.mxu0 0.0
    %686 = vmatpush.msra.mxu0 0.0
    %687 = vmatpush.msra.mxu0 0.0
    %688 = vmatpush.msra.mxu0 0.0
    %689 = vmatpush.msra.mxu0 0.0
    %690 = vmatpush.msra.mxu0 0.0
    %691 = vmatpush.msra.mxu0 %v674
    %692 = vmatmul.f32.gmra.mxu0 %v672
    %v693 = vpop.f32.mrf.mxu0
    %v694 = vadd.f32 0.0, %v693
    %695 = vdwg.mxu0
    %v696 = vsel %vm142, %v663, 0
    %v699 = vsel %vm145, %v664, 0
    %701 = vmatpush.msra.mxu0 0.0
    %702 = vmatpush.msra.mxu0 0.0
    %703 = vmatpush.msra.mxu0 0.0
    %704 = vmatpush.msra.mxu0 0.0
    %705 = vmatpush.msra.mxu0 0.0
    %706 = vmatpush.msra.mxu0 0.0
    %707 = vmatpush.msra.mxu0 0.0
    %708 = vmatpush.msra.mxu0 0.0
    %709 = vmatpush.msra.mxu0 0.0
    %710 = vmatpush.msra.mxu0 0.0
    %711 = vmatpush.msra.mxu0 0.0
    %712 = vmatpush.msra.mxu0 0.0
    %713 = vmatpush.msra.mxu0 0.0
    %714 = vmatpush.msra.mxu0 0.0
    %715 = vmatpush.msra.mxu0 0.0
    %716 = vmatpush.msra.mxu0 %v699
    %717 = vmatmul.f32.gmra.mxu0 %v696
    %v718 = vpop.f32.mrf.mxu0
    %v719 = vadd.f32 %v694, %v718
    %720 = vdwg.mxu0
    %721 = vrot.lane.b32.xlu0 %v663, 120
    %v722 = vpop.permute.xlu0 %721
    %723 = vrot.lane.b32.xlu0 %v664, 127
    %v724 = vpop.permute.xlu0 %723
    %v725 = vsel %vm142, %v722, 0
    %v727 = vsel %vm145, %v724, 0
    %729 = vmatpush.msra.mxu0 0.0
    %730 = vmatpush.msra.mxu0 0.0
    %731 = vmatpush.msra.mxu0 0.0
    %732 = vmatpush.msra.mxu0 0.0
    %733 = vmatpush.msra.mxu0 0.0
    %734 = vmatpush.msra.mxu0 0.0
    %735 = vmatpush.msra.mxu0 0.0
    %736 = vmatpush.msra.mxu0 0.0
    %737 = vmatpush.msra.mxu0 0.0
    %738 = vmatpush.msra.mxu0 0.0
    %739 = vmatpush.msra.mxu0 0.0
    %740 = vmatpush.msra.mxu0 0.0
    %741 = vmatpush.msra.mxu0 0.0
    %742 = vmatpush.msra.mxu0 0.0
    %743 = vmatpush.msra.mxu0 0.0
    %744 = vmatpush.msra.mxu0 %v727
    %745 = vmatmul.f32.gmra.mxu0 %v725
    %v746 = vpop.f32.mrf.mxu0
    %v747 = vadd.f32 0.0, %v746
    %748 = vdwg.mxu0
    %v749 = vadd.f32 %v719, %v747
    %750 = vset.pattern.permute.xlu0 12
    %751 = vperm.xlu0 %750, %v663
    %v752 = vpop.permute.xlu0 %751
    %v754 = vadd.f32 %v749, %v752
    %755 = vmatpush.msra.mxu0 0.0
    %756 = vmatpush.msra.mxu0 0.0
    %757 = vmatpush.msra.mxu0 0.0
    %758 = vmatpush.msra.mxu0 0.0
    %759 = vmatpush.msra.mxu0 0.0
    %760 = vmatpush.msra.mxu0 0.0
    %761 = vmatpush.msra.mxu0 0.0
    %762 = vmatpush.msra.mxu0 0.0
    %763 = vmatpush.msra.mxu0 0.0
    %764 = vmatpush.msra.mxu0 0.0
    %765 = vmatpush.msra.mxu0 0.0
    %766 = vmatpush.msra.mxu0 0.0
    %767 = vmatpush.msra.mxu0 0.0
    %768 = vmatpush.msra.mxu0 0.0
    %769 = vmatpush.msra.mxu0 0.0
    %770 = vmatpush.msra.mxu0 %v727
    %771 = vmatmul.f32.gmra.mxu0 %v672
    %v772 = vpop.f32.mrf.mxu0
    %v773 = vadd.f32 0.0, %v772
    %774 = vdwg.mxu0
    %775 = vmatpush.msra.mxu0 0.0
    %776 = vmatpush.msra.mxu0 0.0
    %777 = vmatpush.msra.mxu0 0.0
    %778 = vmatpush.msra.mxu0 0.0
    %779 = vmatpush.msra.mxu0 0.0
    %780 = vmatpush.msra.mxu0 0.0
    %781 = vmatpush.msra.mxu0 0.0
    %782 = vmatpush.msra.mxu0 0.0
    %783 = vmatpush.msra.mxu0 0.0
    %784 = vmatpush.msra.mxu0 0.0
    %785 = vmatpush.msra.mxu0 0.0
    %786 = vmatpush.msra.mxu0 0.0
    %787 = vmatpush.msra.mxu0 0.0
    %788 = vmatpush.msra.mxu0 0.0
    %789 = vmatpush.msra.mxu0 0.0
    %790 = vmatpush.msra.mxu0 %v674
    %791 = vmatmul.f32.gmra.mxu0 %v696
    %v792 = vpop.f32.mrf.mxu0
    %v793 = vadd.f32 %v773, %v792
    %794 = vdwg.mxu0
    %795 = vrot.lane.b32.xlu0 %v665, 126
    %v796 = vpop.permute.xlu0 %795
    %v797 = vsel %vm145, %v796, 0
    %799 = vmatpush.msra.mxu0 0.0
    %800 = vmatpush.msra.mxu0 0.0
    %801 = vmatpush.msra.mxu0 0.0
    %802 = vmatpush.msra.mxu0 0.0
    %803 = vmatpush.msra.mxu0 0.0
    %804 = vmatpush.msra.mxu0 0.0
    %805 = vmatpush.msra.mxu0 0.0
    %806 = vmatpush.msra.mxu0 0.0
    %807 = vmatpush.msra.mxu0 0.0
    %808 = vmatpush.msra.mxu0 0.0
    %809 = vmatpush.msra.mxu0 0.0
    %810 = vmatpush.msra.mxu0 0.0
    %811 = vmatpush.msra.mxu0 0.0
    %812 = vmatpush.msra.mxu0 0.0
    %813 = vmatpush.msra.mxu0 0.0
    %814 = vmatpush.msra.mxu0 %v797
    %815 = vmatmul.f32.gmra.mxu0 %v725
    %v816 = vpop.f32.mrf.mxu0
    %v817 = vadd.f32 0.0, %v816
    %818 = vdwg.mxu0
    %v819 = vadd.f32 %v793, %v817
    %v820 = vadd.f32 %v819, %v752
    %v821 = vld [vmem:[#allocation2] sm:$0xf]
    %823 = vrot.lane.b32.xlu0 %v821, 127
    %v824 = vpop.permute.xlu0 %823
    %v826 = vadd.f32 %v754, %v824
    %v827 = vmax.f32 %v826, 0.0
    %v828 = vsel %vm116, %v827, 0.0
    %v829 = vld [vmem:[#allocation3] sm:$0xf]
    %831 = vrot.lane.b32.xlu0 %v829, 127
    %v832 = vpop.permute.xlu0 %831
    %v834 = vadd.f32 %v820, %v832
    %v835 = vmax.f32 %v834, 0.0
    %v836 = vsel %vm116, %v835, 0.0
    %838 = vrot.lane.b32.xlu0 %v828, 1
    %v839 = vpop.permute.xlu0 %838
    %841 = vst.msk [vmem:[#allocation2] sm:$0xf] %vm122, %v839
    %843 = vrot.lane.b32.xlu0 %v836, 1
    %v844 = vpop.permute.xlu0 %843
    %846 = vst.msk [vmem:[#allocation3] sm:$0xf] %vm122, %v844
    %v847 = vld [vmem:[%s1 + $0x14] sm:$0xff]
    %v848 = vld [vmem:[#allocation3] sm:$0xf]
    %v849 = vld [vmem:[#allocation2] sm:$0xf]
    %851 = vrot.lane.b32.xlu0 %v847, 124
    %v852 = vpop.permute.xlu0 %851
    %854 = vrot.lane.b32.xlu0 %v849, 127
    %v855 = vpop.permute.xlu0 %854
    %v856 = vsel %vm142, %v852, 0
    %v858 = vsel %vm145, %v855, 0
    %860 = vmatpush.msra.mxu0 0.0
    %861 = vmatpush.msra.mxu0 0.0
    %862 = vmatpush.msra.mxu0 0.0
    %863 = vmatpush.msra.mxu0 0.0
    %864 = vmatpush.msra.mxu0 0.0
    %865 = vmatpush.msra.mxu0 0.0
    %866 = vmatpush.msra.mxu0 0.0
    %867 = vmatpush.msra.mxu0 0.0
    %868 = vmatpush.msra.mxu0 0.0
    %869 = vmatpush.msra.mxu0 0.0
    %870 = vmatpush.msra.mxu0 0.0
    %871 = vmatpush.msra.mxu0 0.0
    %872 = vmatpush.msra.mxu0 0.0
    %873 = vmatpush.msra.mxu0 0.0
    %874 = vmatpush.msra.mxu0 0.0
    %875 = vmatpush.msra.mxu0 %v858
    %876 = vmatmul.f32.gmra.mxu0 %v856
    %v877 = vpop.f32.mrf.mxu0
    %v878 = vadd.f32 0.0, %v877
    %879 = vdwg.mxu0
    %v880 = vsel %vm142, %v847, 0
    %v883 = vsel %vm145, %v848, 0
    %885 = vmatpush.msra.mxu0 0.0
    %886 = vmatpush.msra.mxu0 0.0
    %887 = vmatpush.msra.mxu0 0.0
    %888 = vmatpush.msra.mxu0 0.0
    %889 = vmatpush.msra.mxu0 0.0
    %890 = vmatpush.msra.mxu0 0.0
    %891 = vmatpush.msra.mxu0 0.0
    %892 = vmatpush.msra.mxu0 0.0
    %893 = vmatpush.msra.mxu0 0.0
    %894 = vmatpush.msra.mxu0 0.0
    %895 = vmatpush.msra.mxu0 0.0
    %896 = vmatpush.msra.mxu0 0.0
    %897 = vmatpush.msra.mxu0 0.0
    %898 = vmatpush.msra.mxu0 0.0
    %899 = vmatpush.msra.mxu0 0.0
    %900 = vmatpush.msra.mxu0 %v883
    %901 = vmatmul.f32.gmra.mxu0 %v880
    %v902 = vpop.f32.mrf.mxu0
    %v903 = vadd.f32 %v878, %v902
    %904 = vdwg.mxu0
    %905 = vrot.lane.b32.xlu0 %v847, 120
    %v906 = vpop.permute.xlu0 %905
    %907 = vrot.lane.b32.xlu0 %v848, 127
    %v908 = vpop.permute.xlu0 %907
    %v909 = vsel %vm142, %v906, 0
    %v911 = vsel %vm145, %v908, 0
    %913 = vmatpush.msra.mxu0 0.0
    %914 = vmatpush.msra.mxu0 0.0
    %915 = vmatpush.msra.mxu0 0.0
    %916 = vmatpush.msra.mxu0 0.0
    %917 = vmatpush.msra.mxu0 0.0
    %918 = vmatpush.msra.mxu0 0.0
    %919 = vmatpush.msra.mxu0 0.0
    %920 = vmatpush.msra.mxu0 0.0
    %921 = vmatpush.msra.mxu0 0.0
    %922 = vmatpush.msra.mxu0 0.0
    %923 = vmatpush.msra.mxu0 0.0
    %924 = vmatpush.msra.mxu0 0.0
    %925 = vmatpush.msra.mxu0 0.0
    %926 = vmatpush.msra.mxu0 0.0
    %927 = vmatpush.msra.mxu0 0.0
    %928 = vmatpush.msra.mxu0 %v911
    %929 = vmatmul.f32.gmra.mxu0 %v909
    %v930 = vpop.f32.mrf.mxu0
    %v931 = vadd.f32 0.0, %v930
    %932 = vdwg.mxu0
    %v933 = vadd.f32 %v903, %v931
    %934 = vset.pattern.permute.xlu0 12
    %935 = vperm.xlu0 %934, %v847
    %v936 = vpop.permute.xlu0 %935
    %v938 = vadd.f32 %v933, %v936
    %v939 = vmax.f32 %v938, 0.0
    %v940 = vsel %vm116, %v939, 0.0
    %942 = vrot.lane.b32.xlu0 %v940, 1
    %v943 = vpop.permute.xlu0 %942
    %vm945 = vcmask 1039368
    %946 = vst.msk [vmem:[#allocation7] sm:$0xff] %vm945, %v943
    %v947 = vld [vmem:[%s1 + $0x1c] sm:$0xff]
    %v948 = vld [vmem:[#allocation2] sm:$0xf]
    %950 = vset.pattern.permute.xlu0 4
    %951 = vperm.xlu0 %950, %v947
    %v952 = vpop.permute.xlu0 %951
    %955 = vrot.lane.b32.xlu0 %v948, 127
    %v956 = vpop.permute.xlu0 %955
    %v957 = vsel %vm142, %v947, 0
    %v959 = vsel %vm145, %v956, 0
    %961 = vmatpush.msra.mxu0 0.0
    %962 = vmatpush.msra.mxu0 0.0
    %963 = vmatpush.msra.mxu0 0.0
    %964 = vmatpush.msra.mxu0 0.0
    %965 = vmatpush.msra.mxu0 0.0
    %966 = vmatpush.msra.mxu0 0.0
    %967 = vmatpush.msra.mxu0 0.0
    %968 = vmatpush.msra.mxu0 0.0
    %969 = vmatpush.msra.mxu0 0.0
    %970 = vmatpush.msra.mxu0 0.0
    %971 = vmatpush.msra.mxu0 0.0
    %972 = vmatpush.msra.mxu0 0.0
    %973 = vmatpush.msra.mxu0 0.0
    %974 = vmatpush.msra.mxu0 0.0
    %975 = vmatpush.msra.mxu0 0.0
    %976 = vmatpush.msra.mxu0 %v959
    %977 = vmatmul.f32.gmra.mxu0 %v957
    %v978 = vpop.f32.mrf.mxu0
    %v979 = vadd.f32 %v952, %v978
    %980 = vdwg.mxu0
    %v981 = vld [vmem:[%s1 + $0x24] sm:$0xff]
    %v982 = vld [vmem:[#allocation7] sm:$0xff]
    %984 = vrot.lane.b32.xlu0 %v981, 120
    %v985 = vpop.permute.xlu0 %984
    %987 = vrot.lane.b32.xlu0 %v982, 127
    %v988 = vpop.permute.xlu0 %987
    %vm990 = vcmask 64512
    %v991 = vsel %vm990, %v985, 0
    %993 = vmatpush.msra.mxu0 0.0
    %994 = vmatpush.msra.mxu0 0.0
    %995 = vmatpush.msra.mxu0 0.0
    %996 = vmatpush.msra.mxu0 0.0
    %997 = vmatpush.msra.mxu0 0.0
    %998 = vmatpush.msra.mxu0 0.0
    %999 = vmatpush.msra.mxu0 0.0
    %1000 = vmatpush.msra.mxu0 0.0
    %1001 = vmatpush.msra.mxu0 0.0
    %1002 = vmatpush.msra.mxu0 0.0
    %1003 = vmatpush.msra.mxu0 0.0
    %1004 = vmatpush.msra.mxu0 0.0
    %1005 = vmatpush.msra.mxu0 0.0
    %1006 = vmatpush.msra.mxu0 0.0
    %1007 = vmatpush.msra.mxu0 0.0
    %1008 = vmatpush.msra.mxu0 %v988
    %1009 = vmatmul.f32.gmra.mxu0 %v991
    %v1010 = vpop.f32.mrf.mxu0
    %v1011 = vadd.f32 0.0, %v1010
    %1012 = vdwg.mxu0
    %v1013 = vsel %vm990, %v981, 0
    %1015 = vmatpush.msra.mxu0 0.0
    %1016 = vmatpush.msra.mxu0 0.0
    %1017 = vmatpush.msra.mxu0 0.0
    %1018 = vmatpush.msra.mxu0 0.0
    %1019 = vmatpush.msra.mxu0 0.0
    %1020 = vmatpush.msra.mxu0 0.0
    %1021 = vmatpush.msra.mxu0 0.0
    %1022 = vmatpush.msra.mxu0 0.0
    %1023 = vmatpush.msra.mxu0 0.0
    %1024 = vmatpush.msra.mxu0 0.0
    %1025 = vmatpush.msra.mxu0 0.0
    %1026 = vmatpush.msra.mxu0 0.0
    %1027 = vmatpush.msra.mxu0 0.0
    %1028 = vmatpush.msra.mxu0 0.0
    %1029 = vmatpush.msra.mxu0 0.0
    %1030 = vmatpush.msra.mxu0 %v982
    %1031 = vmatmul.f32.gmra.mxu0 %v1013
    %v1032 = vpop.f32.mrf.mxu0
    %v1033 = vadd.f32 %v1011, %v1032
    %1034 = vdwg.mxu0
    %1035 = vrot.lane.b32.xlu0 %v981, 112
    %v1036 = vpop.permute.xlu0 %1035
    %1037 = vrot.lane.b32.xlu0 %v982, 126
    %v1038 = vpop.permute.xlu0 %1037
    %v1040 = vsel %vm990, %v1036, 0
    %1042 = vmatpush.msra.mxu0 0.0
    %1043 = vmatpush.msra.mxu0 0.0
    %1044 = vmatpush.msra.mxu0 0.0
    %1045 = vmatpush.msra.mxu0 0.0
    %1046 = vmatpush.msra.mxu0 0.0
    %1047 = vmatpush.msra.mxu0 0.0
    %1048 = vmatpush.msra.mxu0 0.0
    %1049 = vmatpush.msra.mxu0 0.0
    %1050 = vmatpush.msra.mxu0 0.0
    %1051 = vmatpush.msra.mxu0 0.0
    %1052 = vmatpush.msra.mxu0 0.0
    %1053 = vmatpush.msra.mxu0 0.0
    %1054 = vmatpush.msra.mxu0 0.0
    %1055 = vmatpush.msra.mxu0 0.0
    %1056 = vmatpush.msra.mxu0 0.0
    %1057 = vmatpush.msra.mxu0 %v1038
    %1058 = vmatmul.f32.gmra.mxu0 %v1040
    %v1059 = vpop.f32.mrf.mxu0
    %v1060 = vadd.f32 0.0, %v1059
    %1061 = vdwg.mxu0
    %v1062 = vadd.f32 %v1033, %v1060
    %1063 = vset.pattern.permute.xlu0 24
    %1064 = vperm.xlu0 %1063, %v981
    %v1065 = vpop.permute.xlu0 %1064
    %v1067 = vadd.f32 %v1062, %v1065
    %v1068 = vadd.f32 %v1067, %v979
    %v1069 = vmax.f32 %v1068, 0.0
    %v1070 = vsel %vm116, %v1069, 0.0
    %1072 = vrot.lane.b32.xlu0 %v1070, 1
    %v1073 = vpop.permute.xlu0 %1072
    %1075 = vst.msk [vmem:[#allocation6] sm:$0xff] %vm945, %v1073
    %v1076 = vld [vmem:[%s1 + $0x2c] sm:$0xff]
    %v1077 = vld [vmem:[#allocation6] sm:$0xff]
    %1079 = vrot.lane.b32.xlu0 %v1076, 120
    %v1080 = vpop.permute.xlu0 %1079
    %1082 = vrot.lane.b32.xlu0 %v1077, 127
    %v1083 = vpop.permute.xlu0 %1082
    %v1085 = vsel %vm990, %v1080, 0
    %1087 = vmatpush.msra.mxu0 0.0
    %1088 = vmatpush.msra.mxu0 0.0
    %1089 = vmatpush.msra.mxu0 0.0
    %1090 = vmatpush.msra.mxu0 0.0
    %1091 = vmatpush.msra.mxu0 0.0
    %1092 = vmatpush.msra.mxu0 0.0
    %1093 = vmatpush.msra.mxu0 0.0
    %1094 = vmatpush.msra.mxu0 0.0
    %1095 = vmatpush.msra.mxu0 0.0
    %1096 = vmatpush.msra.mxu0 0.0
    %1097 = vmatpush.msra.mxu0 0.0
    %1098 = vmatpush.msra.mxu0 0.0
    %1099 = vmatpush.msra.mxu0 0.0
    %1100 = vmatpush.msra.mxu0 0.0
    %1101 = vmatpush.msra.mxu0 0.0
    %1102 = vmatpush.msra.mxu0 %v1083
    %1103 = vmatmul.f32.gmra.mxu0 %v1085
    %v1104 = vpop.f32.mrf.mxu0
    %v1105 = vadd.f32 0.0, %v1104
    %1106 = vdwg.mxu0
    %v1107 = vsel %vm990, %v1076, 0
    %1109 = vmatpush.msra.mxu0 0.0
    %1110 = vmatpush.msra.mxu0 0.0
    %1111 = vmatpush.msra.mxu0 0.0
    %1112 = vmatpush.msra.mxu0 0.0
    %1113 = vmatpush.msra.mxu0 0.0
    %1114 = vmatpush.msra.mxu0 0.0
    %1115 = vmatpush.msra.mxu0 0.0
    %1116 = vmatpush.msra.mxu0 0.0
    %1117 = vmatpush.msra.mxu0 0.0
    %1118 = vmatpush.msra.mxu0 0.0
    %1119 = vmatpush.msra.mxu0 0.0
    %1120 = vmatpush.msra.mxu0 0.0
    %1121 = vmatpush.msra.mxu0 0.0
    %1122 = vmatpush.msra.mxu0 0.0
    %1123 = vmatpush.msra.mxu0 0.0
    %1124 = vmatpush.msra.mxu0 %v1077
    %1125 = vmatmul.f32.gmra.mxu0 %v1107
    %v1126 = vpop.f32.mrf.mxu0
    %v1127 = vadd.f32 %v1105, %v1126
    %1128 = vdwg.mxu0
    %1129 = vrot.lane.b32.xlu0 %v1076, 112
    %v1130 = vpop.permute.xlu0 %1129
    %1131 = vrot.lane.b32.xlu0 %v1077, 126
    %v1132 = vpop.permute.xlu0 %1131
    %v1134 = vsel %vm990, %v1130, 0
    %1136 = vmatpush.msra.mxu0 0.0
    %1137 = vmatpush.msra.mxu0 0.0
    %1138 = vmatpush.msra.mxu0 0.0
    %1139 = vmatpush.msra.mxu0 0.0
    %1140 = vmatpush.msra.mxu0 0.0
    %1141 = vmatpush.msra.mxu0 0.0
    %1142 = vmatpush.msra.mxu0 0.0
    %1143 = vmatpush.msra.mxu0 0.0
    %1144 = vmatpush.msra.mxu0 0.0
    %1145 = vmatpush.msra.mxu0 0.0
    %1146 = vmatpush.msra.mxu0 0.0
    %1147 = vmatpush.msra.mxu0 0.0
    %1148 = vmatpush.msra.mxu0 0.0
    %1149 = vmatpush.msra.mxu0 0.0
    %1150 = vmatpush.msra.mxu0 0.0
    %1151 = vmatpush.msra.mxu0 %v1132
    %1152 = vmatmul.f32.gmra.mxu0 %v1134
    %v1153 = vpop.f32.mrf.mxu0
    %v1154 = vadd.f32 0.0, %v1153
    %1155 = vdwg.mxu0
    %v1156 = vadd.f32 %v1127, %v1154
    %1157 = vset.pattern.permute.xlu0 24
    %1158 = vperm.xlu0 %1157, %v1076
    %v1159 = vpop.permute.xlu0 %1158
    %v1161 = vadd.f32 %v1156, %v1159
    %v1162 = vmax.f32 %v1161, 0.0
    %v1163 = vsel %vm116, %v1162, 0.0
    %1165 = vrot.lane.b32.xlu0 %v1163, 1
    %v1166 = vpop.permute.xlu0 %1165
    %1168 = vst.msk [vmem:[#allocation7] sm:$0xff] %vm945, %v1166
    %v1169 = vld [vmem:[%s1 + $0x34] sm:$0xff]
    %v1170 = vld [vmem:[#allocation7] sm:$0xff]
    %1172 = vrot.lane.b32.xlu0 %v1169, 120
    %v1173 = vpop.permute.xlu0 %1172
    %1175 = vrot.lane.b32.xlu0 %v1170, 127
    %v1176 = vpop.permute.xlu0 %1175
    %v1178 = vsel %vm990, %v1173, 0
    %1180 = vmatpush.msra.mxu0 0.0
    %1181 = vmatpush.msra.mxu0 0.0
    %1182 = vmatpush.msra.mxu0 0.0
    %1183 = vmatpush.msra.mxu0 0.0
    %1184 = vmatpush.msra.mxu0 0.0
    %1185 = vmatpush.msra.mxu0 0.0
    %1186 = vmatpush.msra.mxu0 0.0
    %1187 = vmatpush.msra.mxu0 0.0
    %1188 = vmatpush.msra.mxu0 0.0
    %1189 = vmatpush.msra.mxu0 0.0
    %1190 = vmatpush.msra.mxu0 0.0
    %1191 = vmatpush.msra.mxu0 0.0
    %1192 = vmatpush.msra.mxu0 0.0
    %1193 = vmatpush.msra.mxu0 0.0
    %1194 = vmatpush.msra.mxu0 0.0
    %1195 = vmatpush.msra.mxu0 %v1176
    %1196 = vmatmul.f32.gmra.mxu0 %v1178
    %v1197 = vpop.f32.mrf.mxu0
    %v1198 = vadd.f32 0.0, %v1197
    %1199 = vdwg.mxu0
    %v1200 = vsel %vm990, %v1169, 0
    %1202 = vmatpush.msra.mxu0 0.0
    %1203 = vmatpush.msra.mxu0 0.0
    %1204 = vmatpush.msra.mxu0 0.0
    %1205 = vmatpush.msra.mxu0 0.0
    %1206 = vmatpush.msra.mxu0 0.0
    %1207 = vmatpush.msra.mxu0 0.0
    %1208 = vmatpush.msra.mxu0 0.0
    %1209 = vmatpush.msra.mxu0 0.0
    %1210 = vmatpush.msra.mxu0 0.0
    %1211 = vmatpush.msra.mxu0 0.0
    %1212 = vmatpush.msra.mxu0 0.0
    %1213 = vmatpush.msra.mxu0 0.0
    %1214 = vmatpush.msra.mxu0 0.0
    %1215 = vmatpush.msra.mxu0 0.0
    %1216 = vmatpush.msra.mxu0 0.0
    %1217 = vmatpush.msra.mxu0 %v1170
    %1218 = vmatmul.f32.gmra.mxu0 %v1200
    %v1219 = vpop.f32.mrf.mxu0
    %v1220 = vadd.f32 %v1198, %v1219
    %1221 = vdwg.mxu0
    %1222 = vrot.lane.b32.xlu0 %v1169, 112
    %v1223 = vpop.permute.xlu0 %1222
    %1224 = vrot.lane.b32.xlu0 %v1170, 126
    %v1225 = vpop.permute.xlu0 %1224
    %v1227 = vsel %vm990, %v1223, 0
    %1229 = vmatpush.msra.mxu0 0.0
    %1230 = vmatpush.msra.mxu0 0.0
    %1231 = vmatpush.msra.mxu0 0.0
    %1232 = vmatpush.msra.mxu0 0.0
    %1233 = vmatpush.msra.mxu0 0.0
    %1234 = vmatpush.msra.mxu0 0.0
    %1235 = vmatpush.msra.mxu0 0.0
    %1236 = vmatpush.msra.mxu0 0.0
    %1237 = vmatpush.msra.mxu0 0.0
    %1238 = vmatpush.msra.mxu0 0.0
    %1239 = vmatpush.msra.mxu0 0.0
    %1240 = vmatpush.msra.mxu0 0.0
    %1241 = vmatpush.msra.mxu0 0.0
    %1242 = vmatpush.msra.mxu0 0.0
    %1243 = vmatpush.msra.mxu0 0.0
    %1244 = vmatpush.msra.mxu0 %v1225
    %1245 = vmatmul.f32.gmra.mxu0 %v1227
    %v1246 = vpop.f32.mrf.mxu0
    %v1247 = vadd.f32 0.0, %v1246
    %1248 = vdwg.mxu0
    %v1249 = vadd.f32 %v1220, %v1247
    %1250 = vset.pattern.permute.xlu0 24
    %1251 = vperm.xlu0 %1250, %v1169
    %v1252 = vpop.permute.xlu0 %1251
    %v1254 = vadd.f32 %v1249, %v1252
    %v1255 = vld [vmem:[#allocation6] sm:$0xff]
    %1257 = vrot.lane.b32.xlu0 %v1255, 127
    %v1258 = vpop.permute.xlu0 %1257
    %v1260 = vadd.f32 %v1254, %v1258
    %v1261 = vmax.f32 %v1260, 0.0
    %v1262 = vsel %vm116, %v1261, 0.0
    %1264 = vrot.lane.b32.xlu0 %v1262, 1
    %v1265 = vpop.permute.xlu0 %1264
    %1267 = vst.msk [vmem:[#allocation6] sm:$0xff] %vm945, %v1265
    %v1268 = vld [vmem:[%s1 + $0x3c] sm:$0x1]
    %v1269 = vld [vmem:[#allocation6] sm:$0xff]
    %v1271 = vsel %vm990, %v1268, 0
    %1273 = vmatpush.msra.mxu0 0.0
    %1274 = vmatpush.msra.mxu0 0.0
    %1275 = vmatpush.msra.mxu0 0.0
    %1276 = vmatpush.msra.mxu0 0.0
    %1277 = vmatpush.msra.mxu0 0.0
    %1278 = vmatpush.msra.mxu0 0.0
    %1279 = vmatpush.msra.mxu0 0.0
    %1280 = vmatpush.msra.mxu0 0.0
    %1281 = vmatpush.msra.mxu0 0.0
    %1282 = vmatpush.msra.mxu0 0.0
    %1283 = vmatpush.msra.mxu0 0.0
    %1284 = vmatpush.msra.mxu0 0.0
    %1285 = vmatpush.msra.mxu0 0.0
    %1286 = vmatpush.msra.mxu0 0.0
    %1287 = vmatpush.msra.mxu0 0.0
    %1288 = vmatpush.msra.mxu0 %v1269
    %1289 = vmatmul.f32.gmra.mxu0 %v1271
    %v1290 = vpop.f32.mrf.mxu0
    %v1291 = vadd.f32 0.0, %v1290
    %1292 = vdwg.mxu0
    %vm1293 = vcmp.ge.f32.partialorder %v1291, 0.0
    %v1294 = vmul.f32 %v1291, 0.01
    %v1295 = vsel %vm1293, %v1291, %v1294
    %vm1296 = vcmask 516096
    %1297 = vst.msk [vmem:[#allocation8] sm:$0x1] %vm1296, %v1295
    %1299 = vrot.lane.b32.xlu0 %v1295, 64
    %v1300 = vpop.permute.xlu0 %1299
    %1302 = vst.msk [vmem:[#allocation8 + $0x1] sm:$0x1] %vm1296, %v1300
    %v1303 = vld [vmem:[%s2] sm:$0xff]
    %v1304 = vld [vmem:[%s2 + $0x8] sm:$0xff]
    %v1305 = vld [vmem:[%s2 + $0x10] sm:$0xff]
    %v1306 = vld [vmem:[%s2 + $0x18] sm:$0xff]
    %v1307 = vld [vmem:[%s2 + $0x20] sm:$0xff]
    %v1308 = vld [vmem:[%s2 + $0x28] sm:$0xff]
    %v1309 = vld [vmem:[%s2 + $0x30] sm:$0xff]
    %v1310 = vld [vmem:[%s2 + $0x38] sm:$0xff]
    %v1311 = vld [vmem:[%s2 + $0x40] sm:$0x1]
    %v1312 = vld [vmem:[#allocation8] sm:$0x3]
    %v1313 = vperm.slane %v1311, 0
    %vm1314 = vcmask 523264
    %v1316 = vsel %vm1314, %v1312, 0
    %1318 = vmatpush.msra.mxu0 0.0
    %1319 = vmatpush.msra.mxu0 0.0
    %1320 = vmatpush.msra.mxu0 0.0
    %1321 = vmatpush.msra.mxu0 0.0
    %1322 = vmatpush.msra.mxu0 0.0
    %1323 = vmatpush.msra.mxu0 0.0
    %1324 = vmatpush.msra.mxu0 0.0
    %1325 = vmatpush.msra.mxu0 0.0
    %1326 = vmatpush.msra.mxu0 %v1310
    %1327 = vmatpush.msra.mxu0 %v1309
    %1328 = vmatpush.msra.mxu0 %v1308
    %1329 = vmatpush.msra.mxu0 %v1307
    %1330 = vmatpush.msra.mxu0 %v1306
    %1331 = vmatpush.msra.mxu0 %v1305
    %1332 = vmatpush.msra.mxu0 %v1304
    %1333 = vmatpush.msra.mxu0 %v1303
    %1334 = vmatmul.f32.gmra.mxu0 %v1316
    %v1335 = vpop.f32.mrf.mxu0
    %v1336 = vadd.f32 %v1313, %v1335
    %1337 = vdwg.mxu0
    %vm1338 = vcmp.ge.f32.partialorder %v1336, 0.0
    %v1339 = vmul.f32 %v1336, 0.01
    %v1340 = vsel %vm1338, %v1336, %v1339
    %vm1341 = vcmask 115712
    %1342 = vst.msk [vmem:[#allocation9] sm:$0x3] %vm1341, %v1340
    // Predicated region
    $region14: #{forward_pallas.1} parent=1 // pred_check
      _
    $region15: #{forward_pallas.1} parent=1 // pred_check_branch
      %1344 = sbr.rel (0) target = $region17
    $region16: #{forward_pallas.1} parent=1 // pred_region
      %1346 = vsyncadd [#allocation10], 0
      %s1348 = sshll.u32 [#allocation9], 4
      %s1349 = int_to_ptr.vmem [resolvable:$true] %s1348
      %s1350 = sshll.u32 %s3, 4
      %s1351 = int_to_ptr.hbm [resolvable:$true] %s1350
      %1353 = dma.vmem_to_hbm [thread:$0]  %s1349, 32, %s1351, [#allocation10]
    $region17: #{forward_pallas.1} parent=1 // pred_fallthru
      _
    // Predicated region
    $region18: #{forward_pallas.1} parent=1 // pred_check
      _
    $region19: #{forward_pallas.1} parent=1 // pred_check_branch
      %1355 = sbr.rel (0) target = $region21
    $region20: #{forward_pallas.1} parent=1 // pred_region
      %1357 = dma.done [#allocation10], 32
    $region21: #{forward_pallas.1} parent=1 // pred_fallthru
      _
    %1358 = vsyncpa [#allocation10], 1

</llo_original>
